<compile_context>
chip_gen: v7x
topology: tpu7x:2x2x1
jax: 0.10.0
libtpu: 0.0.40
codegen_flags: <defaults>
</compile_context>

<pallas_src>
import jax
import jax.numpy as jnp
from jax.experimental import pallas as pl
from jax.experimental.pallas import tpu as pltpu

HIDDEN_SIZE = 20
INPUT_SIZE = 10
NUM_LAYERS = 2   # hard-wired as two explicit layers inside the kernel
OUTPUT_SIZE = 1
HP = 128         # lane-padded hidden width (zero-filled padding)


def _rnn_kernel(x_ref,       # (T*B, D)   time-major flattened input
                wih0_ref,    # (D, HP)    layer-0 input weights (lane-padded)
                whh0_ref,    # (HP, HP)   layer-0 recurrent weights
                b0_ref,      # (1, HP)    b_ih0 + b_hh0 (padded)
                w1_ref,      # (2*HP, HP) [W_ih1 ; W_hh1] fused (padded)
                b1_ref,      # (1, HP)    b_ih1 + b_hh1 (padded)
                h_out_ref):  # (B, HP)    last-step top-layer hidden state
    B = h_out_ref.shape[0]
    T = x_ref.shape[0] // B
    Hp = whh0_ref.shape[0]

    # Time-parallel layer-0 input projection (+ folded bias): one well-shaped
    # (T*B, D) x (D, HP) matmul instead of T tiny ones.  At these shapes the
    # whole result is only 2 vregs, so it stays live as a value.
    xproj = (jnp.dot(x_ref[...], wih0_ref[...],
                     preferred_element_type=jnp.float32)
             + b0_ref[...])                                   # (T*B, HP)

    # Hoisted bias broadcast (JAX does not CSE broadcast_in_dim per step).
    b1b = jnp.broadcast_to(b1_ref[...], (B, Hp))

    h0 = jnp.zeros((B, Hp), jnp.float32)
    h1 = jnp.zeros((B, Hp), jnp.float32)

    # Serial recurrence, fully unrolled (T is small and static).  All slices
    # are static (most robust lowering path) and the weight refs are read at
    # the use site, so the forced live set across the unroll is just
    # xproj + h0/h1/cat (a handful of vregs), not the 48-vreg weight set.
    # TODO(synk): optional weight-stationary MXU driving (push_rhs/acc_lhs/pop)
    # would avoid re-pushing whh0 / w1cat on every serial step.
    for t in range(T):
        xp = xproj[t * B:(t + 1) * B, :]                      # contiguous sublanes
        h0 = jnp.tanh(
            xp + jnp.dot(h0, whh0_ref[...],
                         preferred_element_type=jnp.float32))
        cat = jnp.concatenate([h0, h1], axis=1)               # (B, 2*HP), lane-aligned
        h1 = jnp.tanh(
            jnp.dot(cat, w1_ref[...],
                    preferred_element_type=jnp.float32) + b1b)

    h_out_ref[...] = h1                                       # lane-dense store


def _pad_to(w, rows, cols):
    out = jnp.zeros((rows, cols), jnp.float32)
    return out.at[: w.shape[0], : w.shape[1]].set(w)


def prepare_params(params):
    """One-time weight preprocessing (NOT on the per-call path):
    transpose PyTorch (out,in) weights to (in,out), zero-pad to 128 lanes,
    fold each RNN layer's two bias vectors, and fuse [W_ih1; W_hh1]."""
    wih0, whh0, bih0, bhh0, wih1, whh1, bih1, bhh1, wfc, bfc = params
    D = wih0.shape[1]
    wih0_p = _pad_to(wih0.T, D, HP)                               # (D, HP)
    whh0_p = _pad_to(whh0.T, HP, HP)                              # (HP, HP)
    b0_p = _pad_to((bih0 + bhh0)[None, :], 1, HP)                 # (1, HP)
    w1cat = jnp.concatenate(
        [_pad_to(wih1.T, HP, HP), _pad_to(whh1.T, HP, HP)], axis=0)  # (2HP, HP)
    b1_p = _pad_to((bih1 + bhh1)[None, :], 1, HP)                 # (1, HP)
    return (wih0_p, whh0_p, b0_p, w1cat, b1_p, wfc, bfc)


@jax.jit
def simple_rnn_forward(x, prepared):
    """x: (B, T, D_in) float32; prepared = prepare_params(params).
    Returns (B, OUTPUT_SIZE) float32."""
    wih0_p, whh0_p, b0_p, w1cat, b1_p, wfc, bfc = prepared
    B, T, D = x.shape

    # Time-major flatten (tiny) so the per-step slice inside the kernel is a
    # contiguous pair of sublanes.
    x_tm = jnp.transpose(x, (1, 0, 2)).reshape(T * B, D)

    vmem = pl.BlockSpec(memory_space=pltpu.MemorySpace.VMEM)
    h_last = pl.pallas_call(
        _rnn_kernel,
        out_shape=jax.ShapeDtypeStruct((B, HP), jnp.float32),
        in_specs=[vmem] * 6,
        out_specs=vmem,
    )(x_tm, wih0_p, whh0_p, b0_p, w1cat, b1_p)

    # fc epilogue on the 20 real hidden lanes: cheaper here than a padded
    # 128x128 MXU matmul + 64 KiB weight DMA inside the kernel.
    return h_last[:, :HIDDEN_SIZE] @ wfc.T + bfc[None, :]


def init_params(key):
    """Deterministic synthetic parameters with nn.RNN / nn.Linear shapes."""
    H, D, O = HIDDEN_SIZE, INPUT_SIZE, OUTPUT_SIZE
    keys = jax.random.split(key, 10)
    scale = 1.0 / jnp.sqrt(H)

    def u(k, shape):
        return jax.random.uniform(k, shape, jnp.float32, -scale, scale)

    wih0 = u(keys[0], (H, D))   # rnn.weight_ih_l0
    whh0 = u(keys[1], (H, H))   # rnn.weight_hh_l0
    bih0 = u(keys[2], (H,))     # rnn.bias_ih_l0
    bhh0 = u(keys[3], (H,))     # rnn.bias_hh_l0
    wih1 = u(keys[4], (H, H))   # rnn.weight_ih_l1
    whh1 = u(keys[5], (H, H))   # rnn.weight_hh_l1
    bih1 = u(keys[6], (H,))     # rnn.bias_ih_l1
    bhh1 = u(keys[7], (H,))     # rnn.bias_hh_l1
    wfc = u(keys[8], (O, H))    # fc.weight
    bfc = u(keys[9], (O,))      # fc.bias
    return (wih0, whh0, bih0, bhh0, wih1, whh1, bih1, bhh1, wfc, bfc)


def reference_forward(x, params):
    """Pure-JAX reference replicating torch.nn.RNN(tanh) + Linear semantics."""
    wih0, whh0, bih0, bhh0, wih1, whh1, bih1, bhh1, wfc, bfc = params
    B, T, _ = x.shape
    H = whh0.shape[0]
    hi = jax.lax.Precision.HIGHEST   # pin precision so the comparison is stable

    def dot(a, b):
        return jnp.dot(a, b, precision=hi)

    h0 = jnp.zeros((B, H), jnp.float32)
    h1 = jnp.zeros((B, H), jnp.float32)
    for t in range(T):
        x_t = x[:, t, :]
        h0 = jnp.tanh(dot(x_t, wih0.T) + bih0 + dot(h0, whh0.T) + bhh0)
        h1 = jnp.tanh(dot(h0, wih1.T) + bih1 + dot(h1, whh1.T) + bhh1)
    return dot(h1, wfc.T) + bfc


if __name__ == "__main__":
    key = jax.random.PRNGKey(0)
    k_x, k_p = jax.random.split(key)

    B, T = 2, 8
    x = jax.random.normal(k_x, (B, T, INPUT_SIZE), jnp.float32)
    params = init_params(k_p)

    # One-time weight preprocessing (off the per-call hot path).
    prepared = prepare_params(params)

    out = simple_rnn_forward(x, prepared)
    out = jax.block_until_ready(out)

    ref = reference_forward(x, params)
    assert out.shape == (B, OUTPUT_SIZE)
    max_diff = float(jnp.max(jnp.abs(out - ref)))
    # Tolerance covers matmul-precision differences across TPU generations.
    assert jnp.allclose(out, ref, atol=5e-4, rtol=5e-4), f"max diff {max_diff}"

    print("KERNEL_OK")
</pallas_src>

<mosaic_0001>
module attributes {stable_mosaic.version = 11 : i64} {
  func.func @_rnn_kernel(%arg0: memref<16x10xf32, #tpu.memory_space<vmem>>, %arg1: memref<10x128xf32, #tpu.memory_space<vmem>>, %arg2: memref<128x128xf32, #tpu.memory_space<vmem>>, %arg3: memref<1x128xf32, #tpu.memory_space<vmem>>, %arg4: memref<256x128xf32, #tpu.memory_space<vmem>>, %arg5: memref<1x128xf32, #tpu.memory_space<vmem>>, %arg6: memref<2x128xf32, #tpu.memory_space<vmem>>) attributes {dimension_semantics = [], scalar_prefetch = 0 : i64, scratch_operands = 0 : i64, tpu.core_type = #tpu.core_type<tc>} {
    %c0 = arith.constant 0 : index
    %c0_0 = arith.constant 0 : index
    %0 = vector.load %arg0[%c0, %c0_0] : memref<16x10xf32, #tpu.memory_space<vmem>>, vector<16x10xf32>
    %c0_1 = arith.constant 0 : index
    %c0_2 = arith.constant 0 : index
    %1 = vector.load %arg1[%c0_1, %c0_2] : memref<10x128xf32, #tpu.memory_space<vmem>>, vector<10x128xf32>
    %cst = arith.constant dense<0.000000e+00> : vector<16x128xf32>
    %2 = tpu.matmul %0, %1, %cst {dimension_numbers = #tpu.dot_dimension_numbers<[1], [0], [0], [1], [0, 0, 1, 1], [], []>} : vector<16x10xf32>, vector<10x128xf32>, vector<16x128xf32> -> vector<16x128xf32>
    %c0_3 = arith.constant 0 : index
    %c0_4 = arith.constant 0 : index
    %3 = vector.load %arg3[%c0_3, %c0_4] : memref<1x128xf32, #tpu.memory_space<vmem>>, vector<1x128xf32>
    %4 = vector.broadcast %3 : vector<1x128xf32> to vector<16x128xf32>
    %5 = arith.addf %2, %4 : vector<16x128xf32>
    %c0_5 = arith.constant 0 : index
    %c0_6 = arith.constant 0 : index
    %6 = vector.load %arg5[%c0_5, %c0_6] : memref<1x128xf32, #tpu.memory_space<vmem>>, vector<1x128xf32>
    %7 = vector.shape_cast %6 : vector<1x128xf32> to vector<1x128xf32>
    %8 = vector.broadcast %7 : vector<1x128xf32> to vector<2x128xf32>
    %cst_7 = arith.constant 0.000000e+00 : f32
    %9 = vector.broadcast %cst_7 : f32 to vector<2x128xf32>
    %cst_8 = arith.constant 0.000000e+00 : f32
    %10 = vector.broadcast %cst_8 : f32 to vector<2x128xf32>
    %11 = vector.extract_strided_slice %5 {offsets = [0, 0], sizes = [2, 128], strides = [1, 1]} : vector<16x128xf32> to vector<2x128xf32>
    %c0_9 = arith.constant 0 : index
    %c0_10 = arith.constant 0 : index
    %12 = vector.load %arg2[%c0_9, %c0_10] : memref<128x128xf32, #tpu.memory_space<vmem>>, vector<128x128xf32>
    %cst_11 = arith.constant dense<0.000000e+00> : vector<2x128xf32>
    %13 = tpu.matmul %9, %12, %cst_11 {dimension_numbers = #tpu.dot_dimension_numbers<[1], [0], [0], [1], [0, 0, 1, 1], [], []>} : vector<2x128xf32>, vector<128x128xf32>, vector<2x128xf32> -> vector<2x128xf32>
    %14 = arith.addf %11, %13 : vector<2x128xf32>
    %15 = math.tanh %14 : vector<2x128xf32>
    %16 = tpu.concatenate %15, %10 in 1 : vector<2x128xf32>, vector<2x128xf32> -> vector<2x256xf32>
    %c0_12 = arith.constant 0 : index
    %c0_13 = arith.constant 0 : index
    %17 = vector.load %arg4[%c0_12, %c0_13] : memref<256x128xf32, #tpu.memory_space<vmem>>, vector<256x128xf32>
    %cst_14 = arith.constant dense<0.000000e+00> : vector<2x128xf32>
    %18 = tpu.matmul %16, %17, %cst_14 {dimension_numbers = #tpu.dot_dimension_numbers<[1], [0], [0], [1], [0, 0, 1, 1], [], []>} : vector<2x256xf32>, vector<256x128xf32>, vector<2x128xf32> -> vector<2x128xf32>
    %19 = arith.addf %18, %8 : vector<2x128xf32>
    %20 = math.tanh %19 : vector<2x128xf32>
    %21 = vector.extract_strided_slice %5 {offsets = [2, 0], sizes = [2, 128], strides = [1, 1]} : vector<16x128xf32> to vector<2x128xf32>
    %c0_15 = arith.constant 0 : index
    %c0_16 = arith.constant 0 : index
    %22 = vector.load %arg2[%c0_15, %c0_16] : memref<128x128xf32, #tpu.memory_space<vmem>>, vector<128x128xf32>
    %cst_17 = arith.constant dense<0.000000e+00> : vector<2x128xf32>
    %23 = tpu.matmul %15, %22, %cst_17 {dimension_numbers = #tpu.dot_dimension_numbers<[1], [0], [0], [1], [0, 0, 1, 1], [], []>} : vector<2x128xf32>, vector<128x128xf32>, vector<2x128xf32> -> vector<2x128xf32>
    %24 = arith.addf %21, %23 : vector<2x128xf32>
    %25 = math.tanh %24 : vector<2x128xf32>
    %26 = tpu.concatenate %25, %20 in 1 : vector<2x128xf32>, vector<2x128xf32> -> vector<2x256xf32>
    %c0_18 = arith.constant 0 : index
    %c0_19 = arith.constant 0 : index
    %27 = vector.load %arg4[%c0_18, %c0_19] : memref<256x128xf32, #tpu.memory_space<vmem>>, vector<256x128xf32>
    %cst_20 = arith.constant dense<0.000000e+00> : vector<2x128xf32>
    %28 = tpu.matmul %26, %27, %cst_20 {dimension_numbers = #tpu.dot_dimension_numbers<[1], [0], [0], [1], [0, 0, 1, 1], [], []>} : vector<2x256xf32>, vector<256x128xf32>, vector<2x128xf32> -> vector<2x128xf32>
    %29 = arith.addf %28, %8 : vector<2x128xf32>
    %30 = math.tanh %29 : vector<2x128xf32>
    %31 = vector.extract_strided_slice %5 {offsets = [4, 0], sizes = [2, 128], strides = [1, 1]} : vector<16x128xf32> to vector<2x128xf32>
    %c0_21 = arith.constant 0 : index
    %c0_22 = arith.constant 0 : index
    %32 = vector.load %arg2[%c0_21, %c0_22] : memref<128x128xf32, #tpu.memory_space<vmem>>, vector<128x128xf32>
    %cst_23 = arith.constant dense<0.000000e+00> : vector<2x128xf32>
    %33 = tpu.matmul %25, %32, %cst_23 {dimension_numbers = #tpu.dot_dimension_numbers<[1], [0], [0], [1], [0, 0, 1, 1], [], []>} : vector<2x128xf32>, vector<128x128xf32>, vector<2x128xf32> -> vector<2x128xf32>
    %34 = arith.addf %31, %33 : vector<2x128xf32>
    %35 = math.tanh %34 : vector<2x128xf32>
    %36 = tpu.concatenate %35, %30 in 1 : vector<2x128xf32>, vector<2x128xf32> -> vector<2x256xf32>
    %c0_24 = arith.constant 0 : index
    %c0_25 = arith.constant 0 : index
    %37 = vector.load %arg4[%c0_24, %c0_25] : memref<256x128xf32, #tpu.memory_space<vmem>>, vector<256x128xf32>
    %cst_26 = arith.constant dense<0.000000e+00> : vector<2x128xf32>
    %38 = tpu.matmul %36, %37, %cst_26 {dimension_numbers = #tpu.dot_dimension_numbers<[1], [0], [0], [1], [0, 0, 1, 1], [], []>} : vector<2x256xf32>, vector<256x128xf32>, vector<2x128xf32> -> vector<2x128xf32>
    %39 = arith.addf %38, %8 : vector<2x128xf32>
    %40 = math.tanh %39 : vector<2x128xf32>
    %41 = vector.extract_strided_slice %5 {offsets = [6, 0], sizes = [2, 128], strides = [1, 1]} : vector<16x128xf32> to vector<2x128xf32>
    %c0_27 = arith.constant 0 : index
    %c0_28 = arith.constant 0 : index
    %42 = vector.load %arg2[%c0_27, %c0_28] : memref<128x128xf32, #tpu.memory_space<vmem>>, vector<128x128xf32>
    %cst_29 = arith.constant dense<0.000000e+00> : vector<2x128xf32>
    %43 = tpu.matmul %35, %42, %cst_29 {dimension_numbers = #tpu.dot_dimension_numbers<[1], [0], [0], [1], [0, 0, 1, 1], [], []>} : vector<2x128xf32>, vector<128x128xf32>, vector<2x128xf32> -> vector<2x128xf32>
    %44 = arith.addf %41, %43 : vector<2x128xf32>
    %45 = math.tanh %44 : vector<2x128xf32>
    %46 = tpu.concatenate %45, %40 in 1 : vector<2x128xf32>, vector<2x128xf32> -> vector<2x256xf32>
    %c0_30 = arith.constant 0 : index
    %c0_31 = arith.constant 0 : index
    %47 = vector.load %arg4[%c0_30, %c0_31] : memref<256x128xf32, #tpu.memory_space<vmem>>, vector<256x128xf32>
    %cst_32 = arith.constant dense<0.000000e+00> : vector<2x128xf32>
    %48 = tpu.matmul %46, %47, %cst_32 {dimension_numbers = #tpu.dot_dimension_numbers<[1], [0], [0], [1], [0, 0, 1, 1], [], []>} : vector<2x256xf32>, vector<256x128xf32>, vector<2x128xf32> -> vector<2x128xf32>
    %49 = arith.addf %48, %8 : vector<2x128xf32>
    %50 = math.tanh %49 : vector<2x128xf32>
    %51 = vector.extract_strided_slice %5 {offsets = [8, 0], sizes = [2, 128], strides = [1, 1]} : vector<16x128xf32> to vector<2x128xf32>
    %c0_33 = arith.constant 0 : index
    %c0_34 = arith.constant 0 : index
    %52 = vector.load %arg2[%c0_33, %c0_34] : memref<128x128xf32, #tpu.memory_space<vmem>>, vector<128x128xf32>
    %cst_35 = arith.constant dense<0.000000e+00> : vector<2x128xf32>
    %53 = tpu.matmul %45, %52, %cst_35 {dimension_numbers = #tpu.dot_dimension_numbers<[1], [0], [0], [1], [0, 0, 1, 1], [], []>} : vector<2x128xf32>, vector<128x128xf32>, vector<2x128xf32> -> vector<2x128xf32>
    %54 = arith.addf %51, %53 : vector<2x128xf32>
    %55 = math.tanh %54 : vector<2x128xf32>
    %56 = tpu.concatenate %55, %50 in 1 : vector<2x128xf32>, vector<2x128xf32> -> vector<2x256xf32>
    %c0_36 = arith.constant 0 : index
    %c0_37 = arith.constant 0 : index
    %57 = vector.load %arg4[%c0_36, %c0_37] : memref<256x128xf32, #tpu.memory_space<vmem>>, vector<256x128xf32>
    %cst_38 = arith.constant dense<0.000000e+00> : vector<2x128xf32>
    %58 = tpu.matmul %56, %57, %cst_38 {dimension_numbers = #tpu.dot_dimension_numbers<[1], [0], [0], [1], [0, 0, 1, 1], [], []>} : vector<2x256xf32>, vector<256x128xf32>, vector<2x128xf32> -> vector<2x128xf32>
    %59 = arith.addf %58, %8 : vector<2x128xf32>
    %60 = math.tanh %59 : vector<2x128xf32>
    %61 = vector.extract_strided_slice %5 {offsets = [10, 0], sizes = [2, 128], strides = [1, 1]} : vector<16x128xf32> to vector<2x128xf32>
    %c0_39 = arith.constant 0 : index
    %c0_40 = arith.constant 0 : index
    %62 = vector.load %arg2[%c0_39, %c0_40] : memref<128x128xf32, #tpu.memory_space<vmem>>, vector<128x128xf32>
    %cst_41 = arith.constant dense<0.000000e+00> : vector<2x128xf32>
    %63 = tpu.matmul %55, %62, %cst_41 {dimension_numbers = #tpu.dot_dimension_numbers<[1], [0], [0], [1], [0, 0, 1, 1], [], []>} : vector<2x128xf32>, vector<128x128xf32>, vector<2x128xf32> -> vector<2x128xf32>
    %64 = arith.addf %61, %63 : vector<2x128xf32>
    %65 = math.tanh %64 : vector<2x128xf32>
    %66 = tpu.concatenate %65, %60 in 1 : vector<2x128xf32>, vector<2x128xf32> -> vector<2x256xf32>
    %c0_42 = arith.constant 0 : index
    %c0_43 = arith.constant 0 : index
    %67 = vector.load %arg4[%c0_42, %c0_43] : memref<256x128xf32, #tpu.memory_space<vmem>>, vector<256x128xf32>
    %cst_44 = arith.constant dense<0.000000e+00> : vector<2x128xf32>
    %68 = tpu.matmul %66, %67, %cst_44 {dimension_numbers = #tpu.dot_dimension_numbers<[1], [0], [0], [1], [0, 0, 1, 1], [], []>} : vector<2x256xf32>, vector<256x128xf32>, vector<2x128xf32> -> vector<2x128xf32>
    %69 = arith.addf %68, %8 : vector<2x128xf32>
    %70 = math.tanh %69 : vector<2x128xf32>
    %71 = vector.extract_strided_slice %5 {offsets = [12, 0], sizes = [2, 128], strides = [1, 1]} : vector<16x128xf32> to vector<2x128xf32>
    %c0_45 = arith.constant 0 : index
    %c0_46 = arith.constant 0 : index
    %72 = vector.load %arg2[%c0_45, %c0_46] : memref<128x128xf32, #tpu.memory_space<vmem>>, vector<128x128xf32>
    %cst_47 = arith.constant dense<0.000000e+00> : vector<2x128xf32>
    %73 = tpu.matmul %65, %72, %cst_47 {dimension_numbers = #tpu.dot_dimension_numbers<[1], [0], [0], [1], [0, 0, 1, 1], [], []>} : vector<2x128xf32>, vector<128x128xf32>, vector<2x128xf32> -> vector<2x128xf32>
    %74 = arith.addf %71, %73 : vector<2x128xf32>
    %75 = math.tanh %74 : vector<2x128xf32>
    %76 = tpu.concatenate %75, %70 in 1 : vector<2x128xf32>, vector<2x128xf32> -> vector<2x256xf32>
    %c0_48 = arith.constant 0 : index
    %c0_49 = arith.constant 0 : index
    %77 = vector.load %arg4[%c0_48, %c0_49] : memref<256x128xf32, #tpu.memory_space<vmem>>, vector<256x128xf32>
    %cst_50 = arith.constant dense<0.000000e+00> : vector<2x128xf32>
    %78 = tpu.matmul %76, %77, %cst_50 {dimension_numbers = #tpu.dot_dimension_numbers<[1], [0], [0], [1], [0, 0, 1, 1], [], []>} : vector<2x256xf32>, vector<256x128xf32>, vector<2x128xf32> -> vector<2x128xf32>
    %79 = arith.addf %78, %8 : vector<2x128xf32>
    %80 = math.tanh %79 : vector<2x128xf32>
    %81 = vector.extract_strided_slice %5 {offsets = [14, 0], sizes = [2, 128], strides = [1, 1]} : vector<16x128xf32> to vector<2x128xf32>
    %c0_51 = arith.constant 0 : index
    %c0_52 = arith.constant 0 : index
    %82 = vector.load %arg2[%c0_51, %c0_52] : memref<128x128xf32, #tpu.memory_space<vmem>>, vector<128x128xf32>
    %cst_53 = arith.constant dense<0.000000e+00> : vector<2x128xf32>
    %83 = tpu.matmul %75, %82, %cst_53 {dimension_numbers = #tpu.dot_dimension_numbers<[1], [0], [0], [1], [0, 0, 1, 1], [], []>} : vector<2x128xf32>, vector<128x128xf32>, vector<2x128xf32> -> vector<2x128xf32>
    %84 = arith.addf %81, %83 : vector<2x128xf32>
    %85 = math.tanh %84 : vector<2x128xf32>
    %86 = tpu.concatenate %85, %80 in 1 : vector<2x128xf32>, vector<2x128xf32> -> vector<2x256xf32>
    %c0_54 = arith.constant 0 : index
    %c0_55 = arith.constant 0 : index
    %87 = vector.load %arg4[%c0_54, %c0_55] : memref<256x128xf32, #tpu.memory_space<vmem>>, vector<256x128xf32>
    %cst_56 = arith.constant dense<0.000000e+00> : vector<2x128xf32>
    %88 = tpu.matmul %86, %87, %cst_56 {dimension_numbers = #tpu.dot_dimension_numbers<[1], [0], [0], [1], [0, 0, 1, 1], [], []>} : vector<2x256xf32>, vector<256x128xf32>, vector<2x128xf32> -> vector<2x128xf32>
    %89 = arith.addf %88, %8 : vector<2x128xf32>
    %90 = math.tanh %89 : vector<2x128xf32>
    %c0_57 = arith.constant 0 : index
    %c0_58 = arith.constant 0 : index
    %91 = vector.load %arg6[%c0_57, %c0_58] : memref<2x128xf32, #tpu.memory_space<vmem>>, vector<2x128xf32>
    tpu.vector_store %arg6[%c0_57, %c0_58], %90 {strides = array<i32>} : memref<2x128xf32, #tpu.memory_space<vmem>>, vector<2x128xf32>,
    return
  }
}

</mosaic_0001>

<llo_original>
// kernel: simple_rnn_forward.1
$region0: #{simple_rnn_forward.1}
  #allocation0 [shape = 'u32[]', space=smem, size = 0x4, offset = 0x4, fixed_abs, tag = 'smem constant byte address 0x4 - core index']
  #allocation1 [shape = 'u32[144,128]{1,0:T(1,128)}', space=vmem, size = 0x12000, scoped, tag = 'internal scratch']
  %s0 = inlined_call_operand.vmem [shape: f32[16,10], index: 0, kind: input, shape index: {}]
  %s1 = inlined_call_operand.vmem [shape: f32[10,128], index: 1, kind: input, shape index: {}]
  %s2 = inlined_call_operand.hbm [shape: f32[128,128], index: 2, kind: input, shape index: {}]
  %s3 = inlined_call_operand.vmem [shape: f32[1,128], index: 3, kind: input, shape index: {}]
  %s4 = inlined_call_operand.hbm [shape: f32[256,128], index: 4, kind: input, shape index: {}]
  %s5 = inlined_call_operand.vmem [shape: f32[1,128], index: 5, kind: input, shape index: {}]
  %s6 = inlined_call_operand.vmem [shape: f32[2,128], index: 6, kind: output, shape index: {}]
  %s7 = sld [smem:[#allocation0]]
  $region42: #{simple_rnn_forward.1} parent=0
    _
  %s9 = ssub.s32 1, %s7
  %s10 = scalar_select 0, %s9, %s7
  $region1: #{simple_rnn_forward.1} parent=0
    #allocation2 [shape = 'u8[65536]{0}', space=vmem, size = 0x10000, scoped, tag = 'input window, operand 2, single buffered']
    #allocation3 [shape = 's32[1]{0}', space=sflag, size = 0x4, scoped, tag = 'scoped memory for simple_rnn_forward.1']
    #allocation4 [shape = 'u8[131072]{0}', space=vmem, size = 0x20000, scoped, tag = 'input window, operand 4, single buffered']
    #allocation5 [shape = 's32[1]{0}', space=sflag, size = 0x4, scoped, tag = 'scoped memory for simple_rnn_forward.1']
    %11 = vsyncpa [#allocation3], 0
    %12 = vsyncpa [#allocation5], 0
    // Predicated region
    $region2: #{simple_rnn_forward.1} parent=1 // pred_check
      _
    $region3: #{simple_rnn_forward.1} parent=1 // pred_check_branch
      %14 = sbr.rel (0) target = $region5
    $region4: #{simple_rnn_forward.1} parent=1 // pred_region
      _
    $region5: #{simple_rnn_forward.1} parent=1 // pred_fallthru
      _
    // Predicated region
    $region6: #{simple_rnn_forward.1} parent=1 // pred_check
      _
    $region7: #{simple_rnn_forward.1} parent=1 // pred_check_branch
      %16 = sbr.rel (0) target = $region9
    $region8: #{simple_rnn_forward.1} parent=1 // pred_region
      _
    $region9: #{simple_rnn_forward.1} parent=1 // pred_fallthru
      _
    // Predicated region
    $region10: #{simple_rnn_forward.1} parent=1 // pred_check
      _
    $region11: #{simple_rnn_forward.1} parent=1 // pred_check_branch
      %18 = sbr.rel (0) target = $region13
    $region12: #{simple_rnn_forward.1} parent=1 // pred_region
      %s20 = ssub.s32 2048, 2048
      %21 = vsyncadd [#allocation3], %s20
      %s22 = sshll.u32 [#allocation2], 4
      %s23 = int_to_ptr.vmem [resolvable:$true] %s22
      %28 = dma.hbm_to_vmem [thread:$0]  %s2, 2048, %s23, [#allocation3], 128, 128, 8
    $region13: #{simple_rnn_forward.1} parent=1 // pred_fallthru
      _
    // Predicated region
    $region14: #{simple_rnn_forward.1} parent=1 // pred_check
      _
    $region15: #{simple_rnn_forward.1} parent=1 // pred_check_branch
      %30 = sbr.rel (0) target = $region17
    $region16: #{simple_rnn_forward.1} parent=1 // pred_region
      _
    $region17: #{simple_rnn_forward.1} parent=1 // pred_fallthru
      _
    // Predicated region
    $region18: #{simple_rnn_forward.1} parent=1 // pred_check
      _
    $region19: #{simple_rnn_forward.1} parent=1 // pred_check_branch
      %32 = sbr.rel (0) target = $region21
    $region20: #{simple_rnn_forward.1} parent=1 // pred_region
      %s34 = ssub.s32 4096, 4096
      %35 = vsyncadd [#allocation5], %s34
      %s36 = sshll.u32 [#allocation4], 4
      %s37 = int_to_ptr.vmem [resolvable:$true] %s36
      %42 = dma.hbm_to_vmem [thread:$0]  %s4, 4096, %s37, [#allocation5], 128, 128, 8
    $region21: #{simple_rnn_forward.1} parent=1 // pred_fallthru
      _
    // Predicated region
    $region22: #{simple_rnn_forward.1} parent=1 // pred_check
      _
    $region23: #{simple_rnn_forward.1} parent=1 // pred_check_branch
      %44 = sbr.rel (0) target = $region25
    $region24: #{simple_rnn_forward.1} parent=1 // pred_region
      _
    $region25: #{simple_rnn_forward.1} parent=1 // pred_fallthru
      _
    // Predicated region
    $region26: #{simple_rnn_forward.1} parent=1 // pred_check
      _
    $region27: #{simple_rnn_forward.1} parent=1 // pred_check_branch
      %46 = sbr.rel (0) target = $region29
    $region28: #{simple_rnn_forward.1} parent=1 // pred_region
      %47 = dma.done [#allocation3], 2048
    $region29: #{simple_rnn_forward.1} parent=1 // pred_fallthru
      _
    // Predicated region
    $region30: #{simple_rnn_forward.1} parent=1 // pred_check
      _
    $region31: #{simple_rnn_forward.1} parent=1 // pred_check_branch
      %49 = sbr.rel (0) target = $region33
    $region32: #{simple_rnn_forward.1} parent=1 // pred_region
      %50 = dma.done [#allocation5], 4096
    $region33: #{simple_rnn_forward.1} parent=1 // pred_fallthru
      _
    %v51 = vld [vmem:[%s0] sm:$0xff]
    %v52 = vld [vmem:[%s0 + $0x8] sm:$0xff]
    %v53 = vld [vmem:[%s1] sm:$0xff]
    %v54 = vld [vmem:[%s1 + $0x8] sm:$0x3]
    %v55 = vld [vmem:[%s3] sm:$0x1]
    %v57 = vlaneseq
    %v58 = vshrl.u32 %v57, 7
    %v59 = vsub.s32 0, %v58
    %v60 = vrot.slane %v55, %v59
    %vm62 = vcmask 80896
    %v64 = vsel %vm62, %v51, 0
    %v67 = vsel %vm62, %v52, 0
    %vm69 = vcmask 1041408
    %v71 = vsel %vm69, %v54, 0
    %73 = vmatprep.subr.mxu0 0.0
    %74 = vmatpush1.msra.mxu0 %v53
    %75 = vmatprep.subr.mxu0 0.0
    %76 = vmatpush1.msra.mxu0 %v71
    %77 = vmatprep.subr.mxu0 0.0
    %78 = vmatpush1.msra.mxu0 0.0
    %79 = vmatprep.subr.mxu0 0.0
    %80 = vmatpush1.msra.mxu0 0.0
    %81 = vmatprep.subr.mxu0 0.0
    %82 = vmatpush1.msra.mxu0 0.0
    %83 = vmatprep.subr.mxu0 0.0
    %84 = vmatpush1.msra.mxu0 0.0
    %85 = vmatprep.subr.mxu0 0.0
    %86 = vmatpush1.msra.mxu0 0.0
    %87 = vmatprep.subr.mxu0 0.0
    %88 = vmatpush1.msra.mxu0 0.0
    %89 = vmatprep.subr.mxu0 0.0
    %90 = vmatpush1.msra.mxu0 0.0
    %91 = vmatprep.subr.mxu0 0.0
    %92 = vmatpush1.msra.mxu0 0.0
    %93 = vmatprep.subr.mxu0 0.0
    %94 = vmatpush1.msra.mxu0 0.0
    %95 = vmatprep.subr.mxu0 0.0
    %96 = vmatpush1.msra.mxu0 0.0
    %97 = vmatprep.subr.mxu0 0.0
    %98 = vmatpush1.msra.mxu0 0.0
    %99 = vmatprep.subr.mxu0 0.0
    %100 = vmatpush1.msra.mxu0 0.0
    %101 = vmatprep.subr.mxu0 0.0
    %102 = vmatpush1.msra.mxu0 0.0
    %103 = vmatprep.subr.mxu0 0.0
    %104 = vmatpush1.msra.mxu0 0.0
    %105 = vmatprep.subr.mxu0 0.0
    %106 = vmatpush1.msra.mxu0 0.0
    %107 = vmatprep.subr.mxu0 0.0
    %108 = vmatpush1.msra.mxu0 0.0
    %109 = vmatprep.subr.mxu0 0.0
    %110 = vmatpush1.msra.mxu0 0.0
    %111 = vmatprep.subr.mxu0 0.0
    %112 = vmatpush1.msra.mxu0 0.0
    %113 = vmatprep.subr.mxu0 0.0
    %114 = vmatpush1.msra.mxu0 0.0
    %115 = vmatprep.subr.mxu0 0.0
    %116 = vmatpush1.msra.mxu0 0.0
    %117 = vmatprep.subr.mxu0 0.0
    %118 = vmatpush1.msra.mxu0 0.0
    %119 = vmatprep.subr.mxu0 0.0
    %120 = vmatpush1.msra.mxu0 0.0
    %121 = vmatprep.subr.mxu0 0.0
    %122 = vmatpush1.msra.mxu0 0.0
    %123 = vmatprep.subr.mxu0 0.0
    %124 = vmatpush1.msra.mxu0 0.0
    %125 = vmatprep.subr.mxu0 0.0
    %126 = vmatpush1.msra.mxu0 0.0
    %127 = vmatprep.subr.mxu0 0.0
    %128 = vmatpush1.msra.mxu0 0.0
    %129 = vmatprep.subr.mxu0 0.0
    %130 = vmatpush1.msra.mxu0 0.0
    %131 = vmatprep.subr.mxu0 0.0
    %132 = vmatpush1.msra.mxu0 0.0
    %133 = vmatprep.subr.mxu0 0.0
    %134 = vmatpush1.msra.mxu0 0.0
    %135 = vmatprep.subr.mxu0 0.0
    %136 = vmatpush1.msra.mxu0 0.0
    %137 = vmatprep.mubr.f32.mxu0 0.0
    %138 = vmatmul.mubr.f32.gmra.mrb[0].mxu0 %v64
    %v139 = vpop.f32.mrb[0].mxu0
    %v140 = vadd.f32 %v60, %v139
    %v141 = vpop.f32.mrb[0].mxu0
    %142 = vmatprep.mubr.f32.mxu0 0.0
    %143 = vmatmul.mubr.f32.gmra.mrb[0].mxu0 %v67
    %v144 = vpop.f32.mrb[0].mxu0
    %v145 = vadd.f32 %v60, %v144
    %v146 = vpop.f32.mrb[0].mxu0
    %147 = vdwg.mxu0
    %v148 = vld [vmem:[%s5] sm:$0x1]
    %v150 = vlaneseq
    %v151 = vshrl.u32 %v150, 7
    %v152 = vsub.s32 0, %v151
    %v153 = vrot.slane %v148, %v152
    %v155 = vld [vmem:[#allocation2] sm:$0xff]
    %v156 = vld [vmem:[#allocation2 + $0x8] sm:$0xff]
    %v157 = vld [vmem:[#allocation2 + $0x10] sm:$0xff]
    %v158 = vld [vmem:[#allocation2 + $0x18] sm:$0xff]
    %v159 = vld [vmem:[#allocation2 + $0x20] sm:$0xff]
    %v160 = vld [vmem:[#allocation2 + $0x28] sm:$0xff]
    %v161 = vld [vmem:[#allocation2 + $0x30] sm:$0xff]
    %v162 = vld [vmem:[#allocation2 + $0x38] sm:$0xff]
    %v163 = vld [vmem:[#allocation2 + $0x40] sm:$0xff]
    %v164 = vld [vmem:[#allocation2 + $0x48] sm:$0xff]
    %v165 = vld [vmem:[#allocation2 + $0x50] sm:$0xff]
    %v166 = vld [vmem:[#allocation2 + $0x58] sm:$0xff]
    %v167 = vld [vmem:[#allocation2 + $0x60] sm:$0xff]
    %v168 = vld [vmem:[#allocation2 + $0x68] sm:$0xff]
    %v169 = vld [vmem:[#allocation2 + $0x70] sm:$0xff]
    %v170 = vld [vmem:[#allocation2 + $0x78] sm:$0xff]
    %171 = vmatprep.subr.mxu0 0.0
    %172 = vmatpush1.msra.mxu0 %v155
    %173 = vmatprep.subr.mxu0 0.0
    %174 = vmatpush1.msra.mxu0 %v156
    %175 = vmatprep.subr.mxu0 0.0
    %176 = vmatpush1.msra.mxu0 %v157
    %177 = vmatprep.subr.mxu0 0.0
    %178 = vmatpush1.msra.mxu0 %v158
    %179 = vmatprep.subr.mxu0 0.0
    %180 = vmatpush1.msra.mxu0 %v159
    %181 = vmatprep.subr.mxu0 0.0
    %182 = vmatpush1.msra.mxu0 %v160
    %183 = vmatprep.subr.mxu0 0.0
    %184 = vmatpush1.msra.mxu0 %v161
    %185 = vmatprep.subr.mxu0 0.0
    %186 = vmatpush1.msra.mxu0 %v162
    %187 = vmatprep.subr.mxu0 0.0
    %188 = vmatpush1.msra.mxu0 %v163
    %189 = vmatprep.subr.mxu0 0.0
    %190 = vmatpush1.msra.mxu0 %v164
    %191 = vmatprep.subr.mxu0 0.0
    %192 = vmatpush1.msra.mxu0 %v165
    %193 = vmatprep.subr.mxu0 0.0
    %194 = vmatpush1.msra.mxu0 %v166
    %195 = vmatprep.subr.mxu0 0.0
    %196 = vmatpush1.msra.mxu0 %v167
    %197 = vmatprep.subr.mxu0 0.0
    %198 = vmatpush1.msra.mxu0 %v168
    %199 = vmatprep.subr.mxu0 0.0
    %200 = vmatpush1.msra.mxu0 %v169
    %201 = vmatprep.subr.mxu0 0.0
    %202 = vmatpush1.msra.mxu0 %v170
    %203 = vmatprep.subr.mxu0 0.0
    %204 = vmatpush1.msra.mxu0 0.0
    %205 = vmatprep.subr.mxu0 0.0
    %206 = vmatpush1.msra.mxu0 0.0
    %207 = vmatprep.subr.mxu0 0.0
    %208 = vmatpush1.msra.mxu0 0.0
    %209 = vmatprep.subr.mxu0 0.0
    %210 = vmatpush1.msra.mxu0 0.0
    %211 = vmatprep.subr.mxu0 0.0
    %212 = vmatpush1.msra.mxu0 0.0
    %213 = vmatprep.subr.mxu0 0.0
    %214 = vmatpush1.msra.mxu0 0.0
    %215 = vmatprep.subr.mxu0 0.0
    %216 = vmatpush1.msra.mxu0 0.0
    %217 = vmatprep.subr.mxu0 0.0
    %218 = vmatpush1.msra.mxu0 0.0
    %219 = vmatprep.subr.mxu0 0.0
    %220 = vmatpush1.msra.mxu0 0.0
    %221 = vmatprep.subr.mxu0 0.0
    %222 = vmatpush1.msra.mxu0 0.0
    %223 = vmatprep.subr.mxu0 0.0
    %224 = vmatpush1.msra.mxu0 0.0
    %225 = vmatprep.subr.mxu0 0.0
    %226 = vmatpush1.msra.mxu0 0.0
    %227 = vmatprep.subr.mxu0 0.0
    %228 = vmatpush1.msra.mxu0 0.0
    %229 = vmatprep.subr.mxu0 0.0
    %230 = vmatpush1.msra.mxu0 0.0
    %231 = vmatprep.subr.mxu0 0.0
    %232 = vmatpush1.msra.mxu0 0.0
    %233 = vmatprep.subr.mxu0 0.0
    %234 = vmatpush1.msra.mxu0 0.0
    %235 = vmatprep.mubr.f32.mxu0 0.0
    %236 = vmatmul.mubr.f32.gmra.mrb[0].mxu0 0.0
    %v237 = vpop.f32.mrb[0].mxu0
    %v238 = vadd.f32 0.0, %v237
    %v239 = vpop.f32.mrb[0].mxu0
    %240 = vdwg.mxu0
    %v241 = vadd.f32 %v140, %v238
    %v242 = vtanh.pop %v241
    %v243 = vld [vmem:[#allocation4] sm:$0xff]
    %v244 = vld [vmem:[#allocation4 + $0x8] sm:$0xff]
    %v245 = vld [vmem:[#allocation4 + $0x10] sm:$0xff]
    %v246 = vld [vmem:[#allocation4 + $0x18] sm:$0xff]
    %v247 = vld [vmem:[#allocation4 + $0x20] sm:$0xff]
    %v248 = vld [vmem:[#allocation4 + $0x28] sm:$0xff]
    %v249 = vld [vmem:[#allocation4 + $0x30] sm:$0xff]
    %v250 = vld [vmem:[#allocation4 + $0x38] sm:$0xff]
    %v251 = vld [vmem:[#allocation4 + $0x40] sm:$0xff]
    %v252 = vld [vmem:[#allocation4 + $0x48] sm:$0xff]
    %v253 = vld [vmem:[#allocation4 + $0x50] sm:$0xff]
    %v254 = vld [vmem:[#allocation4 + $0x58] sm:$0xff]
    %v255 = vld [vmem:[#allocation4 + $0x60] sm:$0xff]
    %v256 = vld [vmem:[#allocation4 + $0x68] sm:$0xff]
    %v257 = vld [vmem:[#allocation4 + $0x70] sm:$0xff]
    %v258 = vld [vmem:[#allocation4 + $0x78] sm:$0xff]
    %v259 = vld [vmem:[#allocation4 + $0x80] sm:$0xff]
    %v260 = vld [vmem:[#allocation4 + $0x88] sm:$0xff]
    %v261 = vld [vmem:[#allocation4 + $0x90] sm:$0xff]
    %v262 = vld [vmem:[#allocation4 + $0x98] sm:$0xff]
    %v263 = vld [vmem:[#allocation4 + $0xa0] sm:$0xff]
    %v264 = vld [vmem:[#allocation4 + $0xa8] sm:$0xff]
    %v265 = vld [vmem:[#allocation4 + $0xb0] sm:$0xff]
    %v266 = vld [vmem:[#allocation4 + $0xb8] sm:$0xff]
    %v267 = vld [vmem:[#allocation4 + $0xc0] sm:$0xff]
    %v268 = vld [vmem:[#allocation4 + $0xc8] sm:$0xff]
    %v269 = vld [vmem:[#allocation4 + $0xd0] sm:$0xff]
    %v270 = vld [vmem:[#allocation4 + $0xd8] sm:$0xff]
    %v271 = vld [vmem:[#allocation4 + $0xe0] sm:$0xff]
    %v272 = vld [vmem:[#allocation4 + $0xe8] sm:$0xff]
    %v273 = vld [vmem:[#allocation4 + $0xf0] sm:$0xff]
    %v274 = vld [vmem:[#allocation4 + $0xf8] sm:$0xff]
    %275 = vmatprep.subr.mxu0 0.0
    %276 = vmatpush1.msra.mxu0 %v243
    %277 = vmatprep.subr.mxu0 0.0
    %278 = vmatpush1.msra.mxu0 %v244
    %279 = vmatprep.subr.mxu0 0.0
    %280 = vmatpush1.msra.mxu0 %v245
    %281 = vmatprep.subr.mxu0 0.0
    %282 = vmatpush1.msra.mxu0 %v246
    %283 = vmatprep.subr.mxu0 0.0
    %284 = vmatpush1.msra.mxu0 %v247
    %285 = vmatprep.subr.mxu0 0.0
    %286 = vmatpush1.msra.mxu0 %v248
    %287 = vmatprep.subr.mxu0 0.0
    %288 = vmatpush1.msra.mxu0 %v249
    %289 = vmatprep.subr.mxu0 0.0
    %290 = vmatpush1.msra.mxu0 %v250
    %291 = vmatprep.subr.mxu0 0.0
    %292 = vmatpush1.msra.mxu0 %v251
    %293 = vmatprep.subr.mxu0 0.0
    %294 = vmatpush1.msra.mxu0 %v252
    %295 = vmatprep.subr.mxu0 0.0
    %296 = vmatpush1.msra.mxu0 %v253
    %297 = vmatprep.subr.mxu0 0.0
    %298 = vmatpush1.msra.mxu0 %v254
    %299 = vmatprep.subr.mxu0 0.0
    %300 = vmatpush1.msra.mxu0 %v255
    %301 = vmatprep.subr.mxu0 0.0
    %302 = vmatpush1.msra.mxu0 %v256
    %303 = vmatprep.subr.mxu0 0.0
    %304 = vmatpush1.msra.mxu0 %v257
    %305 = vmatprep.subr.mxu0 0.0
    %306 = vmatpush1.msra.mxu0 %v258
    %307 = vmatprep.subr.mxu0 0.0
    %308 = vmatpush1.msra.mxu0 %v259
    %309 = vmatprep.subr.mxu0 0.0
    %310 = vmatpush1.msra.mxu0 %v260
    %311 = vmatprep.subr.mxu0 0.0
    %312 = vmatpush1.msra.mxu0 %v261
    %313 = vmatprep.subr.mxu0 0.0
    %314 = vmatpush1.msra.mxu0 %v262
    %315 = vmatprep.subr.mxu0 0.0
    %316 = vmatpush1.msra.mxu0 %v263
    %317 = vmatprep.subr.mxu0 0.0
    %318 = vmatpush1.msra.mxu0 %v264
    %319 = vmatprep.subr.mxu0 0.0
    %320 = vmatpush1.msra.mxu0 %v265
    %321 = vmatprep.subr.mxu0 0.0
    %322 = vmatpush1.msra.mxu0 %v266
    %323 = vmatprep.subr.mxu0 0.0
    %324 = vmatpush1.msra.mxu0 %v267
    %325 = vmatprep.subr.mxu0 0.0
    %326 = vmatpush1.msra.mxu0 %v268
    %327 = vmatprep.subr.mxu0 0.0
    %328 = vmatpush1.msra.mxu0 %v269
    %329 = vmatprep.subr.mxu0 0.0
    %330 = vmatpush1.msra.mxu0 %v270
    %331 = vmatprep.subr.mxu0 0.0
    %332 = vmatpush1.msra.mxu0 %v271
    %333 = vmatprep.subr.mxu0 0.0
    %334 = vmatpush1.msra.mxu0 %v272
    %335 = vmatprep.subr.mxu0 0.0
    %336 = vmatpush1.msra.mxu0 %v273
    %337 = vmatprep.subr.mxu0 0.0
    %338 = vmatpush1.msra.mxu0 %v274
    %339 = vmatprep.mubr.f32.mxu0 0.0
    %340 = vmatmul.mubr.f32.gmra.mrb[0].mxu0 %v242
    %v341 = vpop.f32.mrb[0].mxu0
    %v342 = vadd.f32 %v153, %v341
    %v343 = vpop.f32.mrb[0].mxu0
    %344 = vdwg.mxu0
    %v345 = vtanh.pop %v342
    %346 = vmatprep.subr.mxu0 0.0
    %347 = vmatpush1.msra.mxu0 %v155
    %348 = vmatprep.subr.mxu0 0.0
    %349 = vmatpush1.msra.mxu0 %v156
    %350 = vmatprep.subr.mxu0 0.0
    %351 = vmatpush1.msra.mxu0 %v157
    %352 = vmatprep.subr.mxu0 0.0
    %353 = vmatpush1.msra.mxu0 %v158
    %354 = vmatprep.subr.mxu0 0.0
    %355 = vmatpush1.msra.mxu0 %v159
    %356 = vmatprep.subr.mxu0 0.0
    %357 = vmatpush1.msra.mxu0 %v160
    %358 = vmatprep.subr.mxu0 0.0
    %359 = vmatpush1.msra.mxu0 %v161
    %360 = vmatprep.subr.mxu0 0.0
    %361 = vmatpush1.msra.mxu0 %v162
    %362 = vmatprep.subr.mxu0 0.0
    %363 = vmatpush1.msra.mxu0 %v163
    %364 = vmatprep.subr.mxu0 0.0
    %365 = vmatpush1.msra.mxu0 %v164
    %366 = vmatprep.subr.mxu0 0.0
    %367 = vmatpush1.msra.mxu0 %v165
    %368 = vmatprep.subr.mxu0 0.0
    %369 = vmatpush1.msra.mxu0 %v166
    %370 = vmatprep.subr.mxu0 0.0
    %371 = vmatpush1.msra.mxu0 %v167
    %372 = vmatprep.subr.mxu0 0.0
    %373 = vmatpush1.msra.mxu0 %v168
    %374 = vmatprep.subr.mxu0 0.0
    %375 = vmatpush1.msra.mxu0 %v169
    %376 = vmatprep.subr.mxu0 0.0
    %377 = vmatpush1.msra.mxu0 %v170
    %378 = vmatprep.subr.mxu0 0.0
    %379 = vmatpush1.msra.mxu0 0.0
    %380 = vmatprep.subr.mxu0 0.0
    %381 = vmatpush1.msra.mxu0 0.0
    %382 = vmatprep.subr.mxu0 0.0
    %383 = vmatpush1.msra.mxu0 0.0
    %384 = vmatprep.subr.mxu0 0.0
    %385 = vmatpush1.msra.mxu0 0.0
    %386 = vmatprep.subr.mxu0 0.0
    %387 = vmatpush1.msra.mxu0 0.0
    %388 = vmatprep.subr.mxu0 0.0
    %389 = vmatpush1.msra.mxu0 0.0
    %390 = vmatprep.subr.mxu0 0.0
    %391 = vmatpush1.msra.mxu0 0.0
    %392 = vmatprep.subr.mxu0 0.0
    %393 = vmatpush1.msra.mxu0 0.0
    %394 = vmatprep.subr.mxu0 0.0
    %395 = vmatpush1.msra.mxu0 0.0
    %396 = vmatprep.subr.mxu0 0.0
    %397 = vmatpush1.msra.mxu0 0.0
    %398 = vmatprep.subr.mxu0 0.0
    %399 = vmatpush1.msra.mxu0 0.0
    %400 = vmatprep.subr.mxu0 0.0
    %401 = vmatpush1.msra.mxu0 0.0
    %402 = vmatprep.subr.mxu0 0.0
    %403 = vmatpush1.msra.mxu0 0.0
    %404 = vmatprep.subr.mxu0 0.0
    %405 = vmatpush1.msra.mxu0 0.0
    %406 = vmatprep.subr.mxu0 0.0
    %407 = vmatpush1.msra.mxu0 0.0
    %408 = vmatprep.subr.mxu0 0.0
    %409 = vmatpush1.msra.mxu0 0.0
    %410 = vmatprep.mubr.f32.mxu0 0.0
    %411 = vmatmul.mubr.f32.gmra.mrb[0].mxu0 %v242
    %v412 = vpop.f32.mrb[0].mxu0
    %v413 = vadd.f32 0.0, %v412
    %v414 = vpop.f32.mrb[0].mxu0
    %415 = vdwg.mxu0
    %v417 = vrot.slane %v413, 6
    %v419 = vadd.f32 %v140, %v417
    %v420 = vtanh.pop %v419
    %v422 = vrot.slane %v345, 6
    %v424 = vrot.slane %v420, 2
    %v425 = vrot.slane %v422, 2
    %428 = vmatprep.subr.mxu0 0.0
    %429 = vmatpush1.msra.mxu0 %v243
    %430 = vmatprep.subr.mxu0 0.0
    %431 = vmatpush1.msra.mxu0 %v244
    %432 = vmatprep.subr.mxu0 0.0
    %433 = vmatpush1.msra.mxu0 %v245
    %434 = vmatprep.subr.mxu0 0.0
    %435 = vmatpush1.msra.mxu0 %v246
    %436 = vmatprep.subr.mxu0 0.0
    %437 = vmatpush1.msra.mxu0 %v247
    %438 = vmatprep.subr.mxu0 0.0
    %439 = vmatpush1.msra.mxu0 %v248
    %440 = vmatprep.subr.mxu0 0.0
    %441 = vmatpush1.msra.mxu0 %v249
    %442 = vmatprep.subr.mxu0 0.0
    %443 = vmatpush1.msra.mxu0 %v250
    %444 = vmatprep.subr.mxu0 0.0
    %445 = vmatpush1.msra.mxu0 %v251
    %446 = vmatprep.subr.mxu0 0.0
    %447 = vmatpush1.msra.mxu0 %v252
    %448 = vmatprep.subr.mxu0 0.0
    %449 = vmatpush1.msra.mxu0 %v253
    %450 = vmatprep.subr.mxu0 0.0
    %451 = vmatpush1.msra.mxu0 %v254
    %452 = vmatprep.subr.mxu0 0.0
    %453 = vmatpush1.msra.mxu0 %v255
    %454 = vmatprep.subr.mxu0 0.0
    %455 = vmatpush1.msra.mxu0 %v256
    %456 = vmatprep.subr.mxu0 0.0
    %457 = vmatpush1.msra.mxu0 %v257
    %458 = vmatprep.subr.mxu0 0.0
    %459 = vmatpush1.msra.mxu0 %v258
    %460 = vmatprep.subr.mxu0 0.0
    %461 = vmatpush1.msra.mxu0 %v259
    %462 = vmatprep.subr.mxu0 0.0
    %463 = vmatpush1.msra.mxu0 %v260
    %464 = vmatprep.subr.mxu0 0.0
    %465 = vmatpush1.msra.mxu0 %v261
    %466 = vmatprep.subr.mxu0 0.0
    %467 = vmatpush1.msra.mxu0 %v262
    %468 = vmatprep.subr.mxu0 0.0
    %469 = vmatpush1.msra.mxu0 %v263
    %470 = vmatprep.subr.mxu0 0.0
    %471 = vmatpush1.msra.mxu0 %v264
    %472 = vmatprep.subr.mxu0 0.0
    %473 = vmatpush1.msra.mxu0 %v265
    %474 = vmatprep.subr.mxu0 0.0
    %475 = vmatpush1.msra.mxu0 %v266
    %476 = vmatprep.subr.mxu0 0.0
    %477 = vmatpush1.msra.mxu0 %v267
    %478 = vmatprep.subr.mxu0 0.0
    %479 = vmatpush1.msra.mxu0 %v268
    %480 = vmatprep.subr.mxu0 0.0
    %481 = vmatpush1.msra.mxu0 %v269
    %482 = vmatprep.subr.mxu0 0.0
    %483 = vmatpush1.msra.mxu0 %v270
    %484 = vmatprep.subr.mxu0 0.0
    %485 = vmatpush1.msra.mxu0 %v271
    %486 = vmatprep.subr.mxu0 0.0
    %487 = vmatpush1.msra.mxu0 %v272
    %488 = vmatprep.subr.mxu0 0.0
    %489 = vmatpush1.msra.mxu0 %v273
    %490 = vmatprep.subr.mxu0 0.0
    %491 = vmatpush1.msra.mxu0 %v274
    %492 = vmatprep.mubr.f32.mxu0 %v425
    %493 = vmatmul.mubr.f32.gmra.mrb[0].mxu0 %v424
    %v494 = vpop.f32.mrb[0].mxu0
    %v495 = vadd.f32 %v153, %v494
    %v496 = vpop.f32.mrb[0].mxu0
    %497 = vdwg.mxu0
    %v498 = vtanh.pop %v495
    %499 = vmatprep.subr.mxu0 0.0
    %500 = vmatpush1.msra.mxu0 %v155
    %501 = vmatprep.subr.mxu0 0.0
    %502 = vmatpush1.msra.mxu0 %v156
    %503 = vmatprep.subr.mxu0 0.0
    %504 = vmatpush1.msra.mxu0 %v157
    %505 = vmatprep.subr.mxu0 0.0
    %506 = vmatpush1.msra.mxu0 %v158
    %507 = vmatprep.subr.mxu0 0.0
    %508 = vmatpush1.msra.mxu0 %v159
    %509 = vmatprep.subr.mxu0 0.0
    %510 = vmatpush1.msra.mxu0 %v160
    %511 = vmatprep.subr.mxu0 0.0
    %512 = vmatpush1.msra.mxu0 %v161
    %513 = vmatprep.subr.mxu0 0.0
    %514 = vmatpush1.msra.mxu0 %v162
    %515 = vmatprep.subr.mxu0 0.0
    %516 = vmatpush1.msra.mxu0 %v163
    %517 = vmatprep.subr.mxu0 0.0
    %518 = vmatpush1.msra.mxu0 %v164
    %519 = vmatprep.subr.mxu0 0.0
    %520 = vmatpush1.msra.mxu0 %v165
    %521 = vmatprep.subr.mxu0 0.0
    %522 = vmatpush1.msra.mxu0 %v166
    %523 = vmatprep.subr.mxu0 0.0
    %524 = vmatpush1.msra.mxu0 %v167
    %525 = vmatprep.subr.mxu0 0.0
    %526 = vmatpush1.msra.mxu0 %v168
    %527 = vmatprep.subr.mxu0 0.0
    %528 = vmatpush1.msra.mxu0 %v169
    %529 = vmatprep.subr.mxu0 0.0
    %530 = vmatpush1.msra.mxu0 %v170
    %531 = vmatprep.subr.mxu0 0.0
    %532 = vmatpush1.msra.mxu0 0.0
    %533 = vmatprep.subr.mxu0 0.0
    %534 = vmatpush1.msra.mxu0 0.0
    %535 = vmatprep.subr.mxu0 0.0
    %536 = vmatpush1.msra.mxu0 0.0
    %537 = vmatprep.subr.mxu0 0.0
    %538 = vmatpush1.msra.mxu0 0.0
    %539 = vmatprep.subr.mxu0 0.0
    %540 = vmatpush1.msra.mxu0 0.0
    %541 = vmatprep.subr.mxu0 0.0
    %542 = vmatpush1.msra.mxu0 0.0
    %543 = vmatprep.subr.mxu0 0.0
    %544 = vmatpush1.msra.mxu0 0.0
    %545 = vmatprep.subr.mxu0 0.0
    %546 = vmatpush1.msra.mxu0 0.0
    %547 = vmatprep.subr.mxu0 0.0
    %548 = vmatpush1.msra.mxu0 0.0
    %549 = vmatprep.subr.mxu0 0.0
    %550 = vmatpush1.msra.mxu0 0.0
    %551 = vmatprep.subr.mxu0 0.0
    %552 = vmatpush1.msra.mxu0 0.0
    %553 = vmatprep.subr.mxu0 0.0
    %554 = vmatpush1.msra.mxu0 0.0
    %555 = vmatprep.subr.mxu0 0.0
    %556 = vmatpush1.msra.mxu0 0.0
    %557 = vmatprep.subr.mxu0 0.0
    %558 = vmatpush1.msra.mxu0 0.0
    %559 = vmatprep.subr.mxu0 0.0
    %560 = vmatpush1.msra.mxu0 0.0
    %561 = vmatprep.subr.mxu0 0.0
    %562 = vmatpush1.msra.mxu0 0.0
    %563 = vmatprep.mubr.f32.mxu0 0.0
    %564 = vmatmul.mubr.f32.gmra.mrb[0].mxu0 %v424
    %v565 = vpop.f32.mrb[0].mxu0
    %v566 = vadd.f32 0.0, %v565
    %v567 = vpop.f32.mrb[0].mxu0
    %568 = vdwg.mxu0
    %v570 = vrot.slane %v566, 4
    %v572 = vadd.f32 %v140, %v570
    %v573 = vtanh.pop %v572
    %v575 = vrot.slane %v498, 4
    %v577 = vrot.slane %v573, 4
    %v578 = vrot.slane %v575, 4
    %581 = vmatprep.subr.mxu0 0.0
    %582 = vmatpush1.msra.mxu0 %v243
    %583 = vmatprep.subr.mxu0 0.0
    %584 = vmatpush1.msra.mxu0 %v244
    %585 = vmatprep.subr.mxu0 0.0
    %586 = vmatpush1.msra.mxu0 %v245
    %587 = vmatprep.subr.mxu0 0.0
    %588 = vmatpush1.msra.mxu0 %v246
    %589 = vmatprep.subr.mxu0 0.0
    %590 = vmatpush1.msra.mxu0 %v247
    %591 = vmatprep.subr.mxu0 0.0
    %592 = vmatpush1.msra.mxu0 %v248
    %593 = vmatprep.subr.mxu0 0.0
    %594 = vmatpush1.msra.mxu0 %v249
    %595 = vmatprep.subr.mxu0 0.0
    %596 = vmatpush1.msra.mxu0 %v250
    %597 = vmatprep.subr.mxu0 0.0
    %598 = vmatpush1.msra.mxu0 %v251
    %599 = vmatprep.subr.mxu0 0.0
    %600 = vmatpush1.msra.mxu0 %v252
    %601 = vmatprep.subr.mxu0 0.0
    %602 = vmatpush1.msra.mxu0 %v253
    %603 = vmatprep.subr.mxu0 0.0
    %604 = vmatpush1.msra.mxu0 %v254
    %605 = vmatprep.subr.mxu0 0.0
    %606 = vmatpush1.msra.mxu0 %v255
    %607 = vmatprep.subr.mxu0 0.0
    %608 = vmatpush1.msra.mxu0 %v256
    %609 = vmatprep.subr.mxu0 0.0
    %610 = vmatpush1.msra.mxu0 %v257
    %611 = vmatprep.subr.mxu0 0.0
    %612 = vmatpush1.msra.mxu0 %v258
    %613 = vmatprep.subr.mxu0 0.0
    %614 = vmatpush1.msra.mxu0 %v259
    %615 = vmatprep.subr.mxu0 0.0
    %616 = vmatpush1.msra.mxu0 %v260
    %617 = vmatprep.subr.mxu0 0.0
    %618 = vmatpush1.msra.mxu0 %v261
    %619 = vmatprep.subr.mxu0 0.0
    %620 = vmatpush1.msra.mxu0 %v262
    %621 = vmatprep.subr.mxu0 0.0
    %622 = vmatpush1.msra.mxu0 %v263
    %623 = vmatprep.subr.mxu0 0.0
    %624 = vmatpush1.msra.mxu0 %v264
    %625 = vmatprep.subr.mxu0 0.0
    %626 = vmatpush1.msra.mxu0 %v265
    %627 = vmatprep.subr.mxu0 0.0
    %628 = vmatpush1.msra.mxu0 %v266
    %629 = vmatprep.subr.mxu0 0.0
    %630 = vmatpush1.msra.mxu0 %v267
    %631 = vmatprep.subr.mxu0 0.0
    %632 = vmatpush1.msra.mxu0 %v268
    %633 = vmatprep.subr.mxu0 0.0
    %634 = vmatpush1.msra.mxu0 %v269
    %635 = vmatprep.subr.mxu0 0.0
    %636 = vmatpush1.msra.mxu0 %v270
    %637 = vmatprep.subr.mxu0 0.0
    %638 = vmatpush1.msra.mxu0 %v271
    %639 = vmatprep.subr.mxu0 0.0
    %640 = vmatpush1.msra.mxu0 %v272
    %641 = vmatprep.subr.mxu0 0.0
    %642 = vmatpush1.msra.mxu0 %v273
    %643 = vmatprep.subr.mxu0 0.0
    %644 = vmatpush1.msra.mxu0 %v274
    %645 = vmatprep.mubr.f32.mxu0 %v578
    %646 = vmatmul.mubr.f32.gmra.mrb[0].mxu0 %v577
    %v647 = vpop.f32.mrb[0].mxu0
    %v648 = vadd.f32 %v153, %v647
    %v649 = vpop.f32.mrb[0].mxu0
    %650 = vdwg.mxu0
    %v651 = vtanh.pop %v648
    %652 = vmatprep.subr.mxu0 0.0
    %653 = vmatpush1.msra.mxu0 %v155
    %654 = vmatprep.subr.mxu0 0.0
    %655 = vmatpush1.msra.mxu0 %v156
    %656 = vmatprep.subr.mxu0 0.0
    %657 = vmatpush1.msra.mxu0 %v157
    %658 = vmatprep.subr.mxu0 0.0
    %659 = vmatpush1.msra.mxu0 %v158
    %660 = vmatprep.subr.mxu0 0.0
    %661 = vmatpush1.msra.mxu0 %v159
    %662 = vmatprep.subr.mxu0 0.0
    %663 = vmatpush1.msra.mxu0 %v160
    %664 = vmatprep.subr.mxu0 0.0
    %665 = vmatpush1.msra.mxu0 %v161
    %666 = vmatprep.subr.mxu0 0.0
    %667 = vmatpush1.msra.mxu0 %v162
    %668 = vmatprep.subr.mxu0 0.0
    %669 = vmatpush1.msra.mxu0 %v163
    %670 = vmatprep.subr.mxu0 0.0
    %671 = vmatpush1.msra.mxu0 %v164
    %672 = vmatprep.subr.mxu0 0.0
    %673 = vmatpush1.msra.mxu0 %v165
    %674 = vmatprep.subr.mxu0 0.0
    %675 = vmatpush1.msra.mxu0 %v166
    %676 = vmatprep.subr.mxu0 0.0
    %677 = vmatpush1.msra.mxu0 %v167
    %678 = vmatprep.subr.mxu0 0.0
    %679 = vmatpush1.msra.mxu0 %v168
    %680 = vmatprep.subr.mxu0 0.0
    %681 = vmatpush1.msra.mxu0 %v169
    %682 = vmatprep.subr.mxu0 0.0
    %683 = vmatpush1.msra.mxu0 %v170
    %684 = vmatprep.subr.mxu0 0.0
    %685 = vmatpush1.msra.mxu0 0.0
    %686 = vmatprep.subr.mxu0 0.0
    %687 = vmatpush1.msra.mxu0 0.0
    %688 = vmatprep.subr.mxu0 0.0
    %689 = vmatpush1.msra.mxu0 0.0
    %690 = vmatprep.subr.mxu0 0.0
    %691 = vmatpush1.msra.mxu0 0.0
    %692 = vmatprep.subr.mxu0 0.0
    %693 = vmatpush1.msra.mxu0 0.0
    %694 = vmatprep.subr.mxu0 0.0
    %695 = vmatpush1.msra.mxu0 0.0
    %696 = vmatprep.subr.mxu0 0.0
    %697 = vmatpush1.msra.mxu0 0.0
    %698 = vmatprep.subr.mxu0 0.0
    %699 = vmatpush1.msra.mxu0 0.0
    %700 = vmatprep.subr.mxu0 0.0
    %701 = vmatpush1.msra.mxu0 0.0
    %702 = vmatprep.subr.mxu0 0.0
    %703 = vmatpush1.msra.mxu0 0.0
    %704 = vmatprep.subr.mxu0 0.0
    %705 = vmatpush1.msra.mxu0 0.0
    %706 = vmatprep.subr.mxu0 0.0
    %707 = vmatpush1.msra.mxu0 0.0
    %708 = vmatprep.subr.mxu0 0.0
    %709 = vmatpush1.msra.mxu0 0.0
    %710 = vmatprep.subr.mxu0 0.0
    %711 = vmatpush1.msra.mxu0 0.0
    %712 = vmatprep.subr.mxu0 0.0
    %713 = vmatpush1.msra.mxu0 0.0
    %714 = vmatprep.subr.mxu0 0.0
    %715 = vmatpush1.msra.mxu0 0.0
    %716 = vmatprep.mubr.f32.mxu0 0.0
    %717 = vmatmul.mubr.f32.gmra.mrb[0].mxu0 %v577
    %v718 = vpop.f32.mrb[0].mxu0
    %v719 = vadd.f32 0.0, %v718
    %v720 = vpop.f32.mrb[0].mxu0
    %721 = vdwg.mxu0
    %v723 = vrot.slane %v719, 2
    %v725 = vadd.f32 %v140, %v723
    %v726 = vtanh.pop %v725
    %v728 = vrot.slane %v651, 2
    %v730 = vrot.slane %v726, 6
    %v731 = vrot.slane %v728, 6
    %734 = vmatprep.subr.mxu0 0.0
    %735 = vmatpush1.msra.mxu0 %v243
    %736 = vmatprep.subr.mxu0 0.0
    %737 = vmatpush1.msra.mxu0 %v244
    %738 = vmatprep.subr.mxu0 0.0
    %739 = vmatpush1.msra.mxu0 %v245
    %740 = vmatprep.subr.mxu0 0.0
    %741 = vmatpush1.msra.mxu0 %v246
    %742 = vmatprep.subr.mxu0 0.0
    %743 = vmatpush1.msra.mxu0 %v247
    %744 = vmatprep.subr.mxu0 0.0
    %745 = vmatpush1.msra.mxu0 %v248
    %746 = vmatprep.subr.mxu0 0.0
    %747 = vmatpush1.msra.mxu0 %v249
    %748 = vmatprep.subr.mxu0 0.0
    %749 = vmatpush1.msra.mxu0 %v250
    %750 = vmatprep.subr.mxu0 0.0
    %751 = vmatpush1.msra.mxu0 %v251
    %752 = vmatprep.subr.mxu0 0.0
    %753 = vmatpush1.msra.mxu0 %v252
    %754 = vmatprep.subr.mxu0 0.0
    %755 = vmatpush1.msra.mxu0 %v253
    %756 = vmatprep.subr.mxu0 0.0
    %757 = vmatpush1.msra.mxu0 %v254
    %758 = vmatprep.subr.mxu0 0.0
    %759 = vmatpush1.msra.mxu0 %v255
    %760 = vmatprep.subr.mxu0 0.0
    %761 = vmatpush1.msra.mxu0 %v256
    %762 = vmatprep.subr.mxu0 0.0
    %763 = vmatpush1.msra.mxu0 %v257
    %764 = vmatprep.subr.mxu0 0.0
    %765 = vmatpush1.msra.mxu0 %v258
    %766 = vmatprep.subr.mxu0 0.0
    %767 = vmatpush1.msra.mxu0 %v259
    %768 = vmatprep.subr.mxu0 0.0
    %769 = vmatpush1.msra.mxu0 %v260
    %770 = vmatprep.subr.mxu0 0.0
    %771 = vmatpush1.msra.mxu0 %v261
    %772 = vmatprep.subr.mxu0 0.0
    %773 = vmatpush1.msra.mxu0 %v262
    %774 = vmatprep.subr.mxu0 0.0
    %775 = vmatpush1.msra.mxu0 %v263
    %776 = vmatprep.subr.mxu0 0.0
    %777 = vmatpush1.msra.mxu0 %v264
    %778 = vmatprep.subr.mxu0 0.0
    %779 = vmatpush1.msra.mxu0 %v265
    %780 = vmatprep.subr.mxu0 0.0
    %781 = vmatpush1.msra.mxu0 %v266
    %782 = vmatprep.subr.mxu0 0.0
    %783 = vmatpush1.msra.mxu0 %v267
    %784 = vmatprep.subr.mxu0 0.0
    %785 = vmatpush1.msra.mxu0 %v268
    %786 = vmatprep.subr.mxu0 0.0
    %787 = vmatpush1.msra.mxu0 %v269
    %788 = vmatprep.subr.mxu0 0.0
    %789 = vmatpush1.msra.mxu0 %v270
    %790 = vmatprep.subr.mxu0 0.0
    %791 = vmatpush1.msra.mxu0 %v271
    %792 = vmatprep.subr.mxu0 0.0
    %793 = vmatpush1.msra.mxu0 %v272
    %794 = vmatprep.subr.mxu0 0.0
    %795 = vmatpush1.msra.mxu0 %v273
    %796 = vmatprep.subr.mxu0 0.0
    %797 = vmatpush1.msra.mxu0 %v274
    %798 = vmatprep.mubr.f32.mxu0 %v731
    %799 = vmatmul.mubr.f32.gmra.mrb[0].mxu0 %v730
    %v800 = vpop.f32.mrb[0].mxu0
    %v801 = vadd.f32 %v153, %v800
    %v802 = vpop.f32.mrb[0].mxu0
    %803 = vdwg.mxu0
    %v804 = vtanh.pop %v801
    %805 = vmatprep.subr.mxu0 0.0
    %806 = vmatpush1.msra.mxu0 %v155
    %807 = vmatprep.subr.mxu0 0.0
    %808 = vmatpush1.msra.mxu0 %v156
    %809 = vmatprep.subr.mxu0 0.0
    %810 = vmatpush1.msra.mxu0 %v157
    %811 = vmatprep.subr.mxu0 0.0
    %812 = vmatpush1.msra.mxu0 %v158
    %813 = vmatprep.subr.mxu0 0.0
    %814 = vmatpush1.msra.mxu0 %v159
    %815 = vmatprep.subr.mxu0 0.0
    %816 = vmatpush1.msra.mxu0 %v160
    %817 = vmatprep.subr.mxu0 0.0
    %818 = vmatpush1.msra.mxu0 %v161
    %819 = vmatprep.subr.mxu0 0.0
    %820 = vmatpush1.msra.mxu0 %v162
    %821 = vmatprep.subr.mxu0 0.0
    %822 = vmatpush1.msra.mxu0 %v163
    %823 = vmatprep.subr.mxu0 0.0
    %824 = vmatpush1.msra.mxu0 %v164
    %825 = vmatprep.subr.mxu0 0.0
    %826 = vmatpush1.msra.mxu0 %v165
    %827 = vmatprep.subr.mxu0 0.0
    %828 = vmatpush1.msra.mxu0 %v166
    %829 = vmatprep.subr.mxu0 0.0
    %830 = vmatpush1.msra.mxu0 %v167
    %831 = vmatprep.subr.mxu0 0.0
    %832 = vmatpush1.msra.mxu0 %v168
    %833 = vmatprep.subr.mxu0 0.0
    %834 = vmatpush1.msra.mxu0 %v169
    %835 = vmatprep.subr.mxu0 0.0
    %836 = vmatpush1.msra.mxu0 %v170
    %837 = vmatprep.subr.mxu0 0.0
    %838 = vmatpush1.msra.mxu0 0.0
    %839 = vmatprep.subr.mxu0 0.0
    %840 = vmatpush1.msra.mxu0 0.0
    %841 = vmatprep.subr.mxu0 0.0
    %842 = vmatpush1.msra.mxu0 0.0
    %843 = vmatprep.subr.mxu0 0.0
    %844 = vmatpush1.msra.mxu0 0.0
    %845 = vmatprep.subr.mxu0 0.0
    %846 = vmatpush1.msra.mxu0 0.0
    %847 = vmatprep.subr.mxu0 0.0
    %848 = vmatpush1.msra.mxu0 0.0
    %849 = vmatprep.subr.mxu0 0.0
    %850 = vmatpush1.msra.mxu0 0.0
    %851 = vmatprep.subr.mxu0 0.0
    %852 = vmatpush1.msra.mxu0 0.0
    %853 = vmatprep.subr.mxu0 0.0
    %854 = vmatpush1.msra.mxu0 0.0
    %855 = vmatprep.subr.mxu0 0.0
    %856 = vmatpush1.msra.mxu0 0.0
    %857 = vmatprep.subr.mxu0 0.0
    %858 = vmatpush1.msra.mxu0 0.0
    %859 = vmatprep.subr.mxu0 0.0
    %860 = vmatpush1.msra.mxu0 0.0
    %861 = vmatprep.subr.mxu0 0.0
    %862 = vmatpush1.msra.mxu0 0.0
    %863 = vmatprep.subr.mxu0 0.0
    %864 = vmatpush1.msra.mxu0 0.0
    %865 = vmatprep.subr.mxu0 0.0
    %866 = vmatpush1.msra.mxu0 0.0
    %867 = vmatprep.subr.mxu0 0.0
    %868 = vmatpush1.msra.mxu0 0.0
    %869 = vmatprep.mubr.f32.mxu0 0.0
    %870 = vmatmul.mubr.f32.gmra.mrb[0].mxu0 %v730
    %v871 = vpop.f32.mrb[0].mxu0
    %v872 = vadd.f32 0.0, %v871
    %v873 = vpop.f32.mrb[0].mxu0
    %874 = vdwg.mxu0
    %v875 = vadd.f32 %v145, %v872
    %v876 = vtanh.pop %v875
    %877 = vmatprep.subr.mxu0 0.0
    %878 = vmatpush1.msra.mxu0 %v243
    %879 = vmatprep.subr.mxu0 0.0
    %880 = vmatpush1.msra.mxu0 %v244
    %881 = vmatprep.subr.mxu0 0.0
    %882 = vmatpush1.msra.mxu0 %v245
    %883 = vmatprep.subr.mxu0 0.0
    %884 = vmatpush1.msra.mxu0 %v246
    %885 = vmatprep.subr.mxu0 0.0
    %886 = vmatpush1.msra.mxu0 %v247
    %887 = vmatprep.subr.mxu0 0.0
    %888 = vmatpush1.msra.mxu0 %v248
    %889 = vmatprep.subr.mxu0 0.0
    %890 = vmatpush1.msra.mxu0 %v249
    %891 = vmatprep.subr.mxu0 0.0
    %892 = vmatpush1.msra.mxu0 %v250
    %893 = vmatprep.subr.mxu0 0.0
    %894 = vmatpush1.msra.mxu0 %v251
    %895 = vmatprep.subr.mxu0 0.0
    %896 = vmatpush1.msra.mxu0 %v252
    %897 = vmatprep.subr.mxu0 0.0
    %898 = vmatpush1.msra.mxu0 %v253
    %899 = vmatprep.subr.mxu0 0.0
    %900 = vmatpush1.msra.mxu0 %v254
    %901 = vmatprep.subr.mxu0 0.0
    %902 = vmatpush1.msra.mxu0 %v255
    %903 = vmatprep.subr.mxu0 0.0
    %904 = vmatpush1.msra.mxu0 %v256
    %905 = vmatprep.subr.mxu0 0.0
    %906 = vmatpush1.msra.mxu0 %v257
    %907 = vmatprep.subr.mxu0 0.0
    %908 = vmatpush1.msra.mxu0 %v258
    %909 = vmatprep.subr.mxu0 0.0
    %910 = vmatpush1.msra.mxu0 %v259
    %911 = vmatprep.subr.mxu0 0.0
    %912 = vmatpush1.msra.mxu0 %v260
    %913 = vmatprep.subr.mxu0 0.0
    %914 = vmatpush1.msra.mxu0 %v261
    %915 = vmatprep.subr.mxu0 0.0
    %916 = vmatpush1.msra.mxu0 %v262
    %917 = vmatprep.subr.mxu0 0.0
    %918 = vmatpush1.msra.mxu0 %v263
    %919 = vmatprep.subr.mxu0 0.0
    %920 = vmatpush1.msra.mxu0 %v264
    %921 = vmatprep.subr.mxu0 0.0
    %922 = vmatpush1.msra.mxu0 %v265
    %923 = vmatprep.subr.mxu0 0.0
    %924 = vmatpush1.msra.mxu0 %v266
    %925 = vmatprep.subr.mxu0 0.0
    %926 = vmatpush1.msra.mxu0 %v267
    %927 = vmatprep.subr.mxu0 0.0
    %928 = vmatpush1.msra.mxu0 %v268
    %929 = vmatprep.subr.mxu0 0.0
    %930 = vmatpush1.msra.mxu0 %v269
    %931 = vmatprep.subr.mxu0 0.0
    %932 = vmatpush1.msra.mxu0 %v270
    %933 = vmatprep.subr.mxu0 0.0
    %934 = vmatpush1.msra.mxu0 %v271
    %935 = vmatprep.subr.mxu0 0.0
    %936 = vmatpush1.msra.mxu0 %v272
    %937 = vmatprep.subr.mxu0 0.0
    %938 = vmatpush1.msra.mxu0 %v273
    %939 = vmatprep.subr.mxu0 0.0
    %940 = vmatpush1.msra.mxu0 %v274
    %941 = vmatprep.mubr.f32.mxu0 %v804
    %942 = vmatmul.mubr.f32.gmra.mrb[0].mxu0 %v876
    %v943 = vpop.f32.mrb[0].mxu0
    %v944 = vadd.f32 %v153, %v943
    %v945 = vpop.f32.mrb[0].mxu0
    %946 = vdwg.mxu0
    %v947 = vtanh.pop %v944
    %948 = vmatprep.subr.mxu0 0.0
    %949 = vmatpush1.msra.mxu0 %v155
    %950 = vmatprep.subr.mxu0 0.0
    %951 = vmatpush1.msra.mxu0 %v156
    %952 = vmatprep.subr.mxu0 0.0
    %953 = vmatpush1.msra.mxu0 %v157
    %954 = vmatprep.subr.mxu0 0.0
    %955 = vmatpush1.msra.mxu0 %v158
    %956 = vmatprep.subr.mxu0 0.0
    %957 = vmatpush1.msra.mxu0 %v159
    %958 = vmatprep.subr.mxu0 0.0
    %959 = vmatpush1.msra.mxu0 %v160
    %960 = vmatprep.subr.mxu0 0.0
    %961 = vmatpush1.msra.mxu0 %v161
    %962 = vmatprep.subr.mxu0 0.0
    %963 = vmatpush1.msra.mxu0 %v162
    %964 = vmatprep.subr.mxu0 0.0
    %965 = vmatpush1.msra.mxu0 %v163
    %966 = vmatprep.subr.mxu0 0.0
    %967 = vmatpush1.msra.mxu0 %v164
    %968 = vmatprep.subr.mxu0 0.0
    %969 = vmatpush1.msra.mxu0 %v165
    %970 = vmatprep.subr.mxu0 0.0
    %971 = vmatpush1.msra.mxu0 %v166
    %972 = vmatprep.subr.mxu0 0.0
    %973 = vmatpush1.msra.mxu0 %v167
    %974 = vmatprep.subr.mxu0 0.0
    %975 = vmatpush1.msra.mxu0 %v168
    %976 = vmatprep.subr.mxu0 0.0
    %977 = vmatpush1.msra.mxu0 %v169
    %978 = vmatprep.subr.mxu0 0.0
    %979 = vmatpush1.msra.mxu0 %v170
    %980 = vmatprep.subr.mxu0 0.0
    %981 = vmatpush1.msra.mxu0 0.0
    %982 = vmatprep.subr.mxu0 0.0
    %983 = vmatpush1.msra.mxu0 0.0
    %984 = vmatprep.subr.mxu0 0.0
    %985 = vmatpush1.msra.mxu0 0.0
    %986 = vmatprep.subr.mxu0 0.0
    %987 = vmatpush1.msra.mxu0 0.0
    %988 = vmatprep.subr.mxu0 0.0
    %989 = vmatpush1.msra.mxu0 0.0
    %990 = vmatprep.subr.mxu0 0.0
    %991 = vmatpush1.msra.mxu0 0.0
    %992 = vmatprep.subr.mxu0 0.0
    %993 = vmatpush1.msra.mxu0 0.0
    %994 = vmatprep.subr.mxu0 0.0
    %995 = vmatpush1.msra.mxu0 0.0
    %996 = vmatprep.subr.mxu0 0.0
    %997 = vmatpush1.msra.mxu0 0.0
    %998 = vmatprep.subr.mxu0 0.0
    %999 = vmatpush1.msra.mxu0 0.0
    %1000 = vmatprep.subr.mxu0 0.0
    %1001 = vmatpush1.msra.mxu0 0.0
    %1002 = vmatprep.subr.mxu0 0.0
    %1003 = vmatpush1.msra.mxu0 0.0
    %1004 = vmatprep.subr.mxu0 0.0
    %1005 = vmatpush1.msra.mxu0 0.0
    %1006 = vmatprep.subr.mxu0 0.0
    %1007 = vmatpush1.msra.mxu0 0.0
    %1008 = vmatprep.subr.mxu0 0.0
    %1009 = vmatpush1.msra.mxu0 0.0
    %1010 = vmatprep.subr.mxu0 0.0
    %1011 = vmatpush1.msra.mxu0 0.0
    %1012 = vmatprep.mubr.f32.mxu0 0.0
    %1013 = vmatmul.mubr.f32.gmra.mrb[0].mxu0 %v876
    %v1014 = vpop.f32.mrb[0].mxu0
    %v1015 = vadd.f32 0.0, %v1014
    %v1016 = vpop.f32.mrb[0].mxu0
    %1017 = vdwg.mxu0
    %v1019 = vrot.slane %v1015, 6
    %v1021 = vadd.f32 %v145, %v1019
    %v1022 = vtanh.pop %v1021
    %v1024 = vrot.slane %v947, 6
    %v1026 = vrot.slane %v1022, 2
    %v1027 = vrot.slane %v1024, 2
    %1030 = vmatprep.subr.mxu0 0.0
    %1031 = vmatpush1.msra.mxu0 %v243
    %1032 = vmatprep.subr.mxu0 0.0
    %1033 = vmatpush1.msra.mxu0 %v244
    %1034 = vmatprep.subr.mxu0 0.0
    %1035 = vmatpush1.msra.mxu0 %v245
    %1036 = vmatprep.subr.mxu0 0.0
    %1037 = vmatpush1.msra.mxu0 %v246
    %1038 = vmatprep.subr.mxu0 0.0
    %1039 = vmatpush1.msra.mxu0 %v247
    %1040 = vmatprep.subr.mxu0 0.0
    %1041 = vmatpush1.msra.mxu0 %v248
    %1042 = vmatprep.subr.mxu0 0.0
    %1043 = vmatpush1.msra.mxu0 %v249
    %1044 = vmatprep.subr.mxu0 0.0
    %1045 = vmatpush1.msra.mxu0 %v250
    %1046 = vmatprep.subr.mxu0 0.0
    %1047 = vmatpush1.msra.mxu0 %v251
    %1048 = vmatprep.subr.mxu0 0.0
    %1049 = vmatpush1.msra.mxu0 %v252
    %1050 = vmatprep.subr.mxu0 0.0
    %1051 = vmatpush1.msra.mxu0 %v253
    %1052 = vmatprep.subr.mxu0 0.0
    %1053 = vmatpush1.msra.mxu0 %v254
    %1054 = vmatprep.subr.mxu0 0.0
    %1055 = vmatpush1.msra.mxu0 %v255
    %1056 = vmatprep.subr.mxu0 0.0
    %1057 = vmatpush1.msra.mxu0 %v256
    %1058 = vmatprep.subr.mxu0 0.0
    %1059 = vmatpush1.msra.mxu0 %v257
    %1060 = vmatprep.subr.mxu0 0.0
    %1061 = vmatpush1.msra.mxu0 %v258
    %1062 = vmatprep.subr.mxu0 0.0
    %1063 = vmatpush1.msra.mxu0 %v259
    %1064 = vmatprep.subr.mxu0 0.0
    %1065 = vmatpush1.msra.mxu0 %v260
    %1066 = vmatprep.subr.mxu0 0.0
    %1067 = vmatpush1.msra.mxu0 %v261
    %1068 = vmatprep.subr.mxu0 0.0
    %1069 = vmatpush1.msra.mxu0 %v262
    %1070 = vmatprep.subr.mxu0 0.0
    %1071 = vmatpush1.msra.mxu0 %v263
    %1072 = vmatprep.subr.mxu0 0.0
    %1073 = vmatpush1.msra.mxu0 %v264
    %1074 = vmatprep.subr.mxu0 0.0
    %1075 = vmatpush1.msra.mxu0 %v265
    %1076 = vmatprep.subr.mxu0 0.0
    %1077 = vmatpush1.msra.mxu0 %v266
    %1078 = vmatprep.subr.mxu0 0.0
    %1079 = vmatpush1.msra.mxu0 %v267
    %1080 = vmatprep.subr.mxu0 0.0
    %1081 = vmatpush1.msra.mxu0 %v268
    %1082 = vmatprep.subr.mxu0 0.0
    %1083 = vmatpush1.msra.mxu0 %v269
    %1084 = vmatprep.subr.mxu0 0.0
    %1085 = vmatpush1.msra.mxu0 %v270
    %1086 = vmatprep.subr.mxu0 0.0
    %1087 = vmatpush1.msra.mxu0 %v271
    %1088 = vmatprep.subr.mxu0 0.0
    %1089 = vmatpush1.msra.mxu0 %v272
    %1090 = vmatprep.subr.mxu0 0.0
    %1091 = vmatpush1.msra.mxu0 %v273
    %1092 = vmatprep.subr.mxu0 0.0
    %1093 = vmatpush1.msra.mxu0 %v274
    %1094 = vmatprep.mubr.f32.mxu0 %v1027
    %1095 = vmatmul.mubr.f32.gmra.mrb[0].mxu0 %v1026
    %v1096 = vpop.f32.mrb[0].mxu0
    %v1097 = vadd.f32 %v153, %v1096
    %v1098 = vpop.f32.mrb[0].mxu0
    %1099 = vdwg.mxu0
    %v1100 = vtanh.pop %v1097
    %1101 = vmatprep.subr.mxu0 0.0
    %1102 = vmatpush1.msra.mxu0 %v155
    %1103 = vmatprep.subr.mxu0 0.0
    %1104 = vmatpush1.msra.mxu0 %v156
    %1105 = vmatprep.subr.mxu0 0.0
    %1106 = vmatpush1.msra.mxu0 %v157
    %1107 = vmatprep.subr.mxu0 0.0
    %1108 = vmatpush1.msra.mxu0 %v158
    %1109 = vmatprep.subr.mxu0 0.0
    %1110 = vmatpush1.msra.mxu0 %v159
    %1111 = vmatprep.subr.mxu0 0.0
    %1112 = vmatpush1.msra.mxu0 %v160
    %1113 = vmatprep.subr.mxu0 0.0
    %1114 = vmatpush1.msra.mxu0 %v161
    %1115 = vmatprep.subr.mxu0 0.0
    %1116 = vmatpush1.msra.mxu0 %v162
    %1117 = vmatprep.subr.mxu0 0.0
    %1118 = vmatpush1.msra.mxu0 %v163
    %1119 = vmatprep.subr.mxu0 0.0
    %1120 = vmatpush1.msra.mxu0 %v164
    %1121 = vmatprep.subr.mxu0 0.0
    %1122 = vmatpush1.msra.mxu0 %v165
    %1123 = vmatprep.subr.mxu0 0.0
    %1124 = vmatpush1.msra.mxu0 %v166
    %1125 = vmatprep.subr.mxu0 0.0
    %1126 = vmatpush1.msra.mxu0 %v167
    %1127 = vmatprep.subr.mxu0 0.0
    %1128 = vmatpush1.msra.mxu0 %v168
    %1129 = vmatprep.subr.mxu0 0.0
    %1130 = vmatpush1.msra.mxu0 %v169
    %1131 = vmatprep.subr.mxu0 0.0
    %1132 = vmatpush1.msra.mxu0 %v170
    %1133 = vmatprep.subr.mxu0 0.0
    %1134 = vmatpush1.msra.mxu0 0.0
    %1135 = vmatprep.subr.mxu0 0.0
    %1136 = vmatpush1.msra.mxu0 0.0
    %1137 = vmatprep.subr.mxu0 0.0
    %1138 = vmatpush1.msra.mxu0 0.0
    %1139 = vmatprep.subr.mxu0 0.0
    %1140 = vmatpush1.msra.mxu0 0.0
    %1141 = vmatprep.subr.mxu0 0.0
    %1142 = vmatpush1.msra.mxu0 0.0
    %1143 = vmatprep.subr.mxu0 0.0
    %1144 = vmatpush1.msra.mxu0 0.0
    %1145 = vmatprep.subr.mxu0 0.0
    %1146 = vmatpush1.msra.mxu0 0.0
    %1147 = vmatprep.subr.mxu0 0.0
    %1148 = vmatpush1.msra.mxu0 0.0
    %1149 = vmatprep.subr.mxu0 0.0
    %1150 = vmatpush1.msra.mxu0 0.0
    %1151 = vmatprep.subr.mxu0 0.0
    %1152 = vmatpush1.msra.mxu0 0.0
    %1153 = vmatprep.subr.mxu0 0.0
    %1154 = vmatpush1.msra.mxu0 0.0
    %1155 = vmatprep.subr.mxu0 0.0
    %1156 = vmatpush1.msra.mxu0 0.0
    %1157 = vmatprep.subr.mxu0 0.0
    %1158 = vmatpush1.msra.mxu0 0.0
    %1159 = vmatprep.subr.mxu0 0.0
    %1160 = vmatpush1.msra.mxu0 0.0
    %1161 = vmatprep.subr.mxu0 0.0
    %1162 = vmatpush1.msra.mxu0 0.0
    %1163 = vmatprep.subr.mxu0 0.0
    %1164 = vmatpush1.msra.mxu0 0.0
    %1165 = vmatprep.mubr.f32.mxu0 0.0
    %1166 = vmatmul.mubr.f32.gmra.mrb[0].mxu0 %v1026
    %v1167 = vpop.f32.mrb[0].mxu0
    %v1168 = vadd.f32 0.0, %v1167
    %v1169 = vpop.f32.mrb[0].mxu0
    %1170 = vdwg.mxu0
    %v1172 = vrot.slane %v1168, 4
    %v1174 = vadd.f32 %v145, %v1172
    %v1175 = vtanh.pop %v1174
    %v1177 = vrot.slane %v1100, 4
    %v1179 = vrot.slane %v1175, 4
    %v1180 = vrot.slane %v1177, 4
    %1183 = vmatprep.subr.mxu0 0.0
    %1184 = vmatpush1.msra.mxu0 %v243
    %1185 = vmatprep.subr.mxu0 0.0
    %1186 = vmatpush1.msra.mxu0 %v244
    %1187 = vmatprep.subr.mxu0 0.0
    %1188 = vmatpush1.msra.mxu0 %v245
    %1189 = vmatprep.subr.mxu0 0.0
    %1190 = vmatpush1.msra.mxu0 %v246
    %1191 = vmatprep.subr.mxu0 0.0
    %1192 = vmatpush1.msra.mxu0 %v247
    %1193 = vmatprep.subr.mxu0 0.0
    %1194 = vmatpush1.msra.mxu0 %v248
    %1195 = vmatprep.subr.mxu0 0.0
    %1196 = vmatpush1.msra.mxu0 %v249
    %1197 = vmatprep.subr.mxu0 0.0
    %1198 = vmatpush1.msra.mxu0 %v250
    %1199 = vmatprep.subr.mxu0 0.0
    %1200 = vmatpush1.msra.mxu0 %v251
    %1201 = vmatprep.subr.mxu0 0.0
    %1202 = vmatpush1.msra.mxu0 %v252
    %1203 = vmatprep.subr.mxu0 0.0
    %1204 = vmatpush1.msra.mxu0 %v253
    %1205 = vmatprep.subr.mxu0 0.0
    %1206 = vmatpush1.msra.mxu0 %v254
    %1207 = vmatprep.subr.mxu0 0.0
    %1208 = vmatpush1.msra.mxu0 %v255
    %1209 = vmatprep.subr.mxu0 0.0
    %1210 = vmatpush1.msra.mxu0 %v256
    %1211 = vmatprep.subr.mxu0 0.0
    %1212 = vmatpush1.msra.mxu0 %v257
    %1213 = vmatprep.subr.mxu0 0.0
    %1214 = vmatpush1.msra.mxu0 %v258
    %1215 = vmatprep.subr.mxu0 0.0
    %1216 = vmatpush1.msra.mxu0 %v259
    %1217 = vmatprep.subr.mxu0 0.0
    %1218 = vmatpush1.msra.mxu0 %v260
    %1219 = vmatprep.subr.mxu0 0.0
    %1220 = vmatpush1.msra.mxu0 %v261
    %1221 = vmatprep.subr.mxu0 0.0
    %1222 = vmatpush1.msra.mxu0 %v262
    %1223 = vmatprep.subr.mxu0 0.0
    %1224 = vmatpush1.msra.mxu0 %v263
    %1225 = vmatprep.subr.mxu0 0.0
    %1226 = vmatpush1.msra.mxu0 %v264
    %1227 = vmatprep.subr.mxu0 0.0
    %1228 = vmatpush1.msra.mxu0 %v265
    %1229 = vmatprep.subr.mxu0 0.0
    %1230 = vmatpush1.msra.mxu0 %v266
    %1231 = vmatprep.subr.mxu0 0.0
    %1232 = vmatpush1.msra.mxu0 %v267
    %1233 = vmatprep.subr.mxu0 0.0
    %1234 = vmatpush1.msra.mxu0 %v268
    %1235 = vmatprep.subr.mxu0 0.0
    %1236 = vmatpush1.msra.mxu0 %v269
    %1237 = vmatprep.subr.mxu0 0.0
    %1238 = vmatpush1.msra.mxu0 %v270
    %1239 = vmatprep.subr.mxu0 0.0
    %1240 = vmatpush1.msra.mxu0 %v271
    %1241 = vmatprep.subr.mxu0 0.0
    %1242 = vmatpush1.msra.mxu0 %v272
    %1243 = vmatprep.subr.mxu0 0.0
    %1244 = vmatpush1.msra.mxu0 %v273
    %1245 = vmatprep.subr.mxu0 0.0
    %1246 = vmatpush1.msra.mxu0 %v274
    %1247 = vmatprep.mubr.f32.mxu0 %v1180
    %1248 = vmatmul.mubr.f32.gmra.mrb[0].mxu0 %v1179
    %v1249 = vpop.f32.mrb[0].mxu0
    %v1250 = vadd.f32 %v153, %v1249
    %v1251 = vpop.f32.mrb[0].mxu0
    %1252 = vdwg.mxu0
    %v1253 = vtanh.pop %v1250
    %1254 = vmatprep.subr.mxu0 0.0
    %1255 = vmatpush1.msra.mxu0 %v155
    %1256 = vmatprep.subr.mxu0 0.0
    %1257 = vmatpush1.msra.mxu0 %v156
    %1258 = vmatprep.subr.mxu0 0.0
    %1259 = vmatpush1.msra.mxu0 %v157
    %1260 = vmatprep.subr.mxu0 0.0
    %1261 = vmatpush1.msra.mxu0 %v158
    %1262 = vmatprep.subr.mxu0 0.0
    %1263 = vmatpush1.msra.mxu0 %v159
    %1264 = vmatprep.subr.mxu0 0.0
    %1265 = vmatpush1.msra.mxu0 %v160
    %1266 = vmatprep.subr.mxu0 0.0
    %1267 = vmatpush1.msra.mxu0 %v161
    %1268 = vmatprep.subr.mxu0 0.0
    %1269 = vmatpush1.msra.mxu0 %v162
    %1270 = vmatprep.subr.mxu0 0.0
    %1271 = vmatpush1.msra.mxu0 %v163
    %1272 = vmatprep.subr.mxu0 0.0
    %1273 = vmatpush1.msra.mxu0 %v164
    %1274 = vmatprep.subr.mxu0 0.0
    %1275 = vmatpush1.msra.mxu0 %v165
    %1276 = vmatprep.subr.mxu0 0.0
    %1277 = vmatpush1.msra.mxu0 %v166
    %1278 = vmatprep.subr.mxu0 0.0
    %1279 = vmatpush1.msra.mxu0 %v167
    %1280 = vmatprep.subr.mxu0 0.0
    %1281 = vmatpush1.msra.mxu0 %v168
    %1282 = vmatprep.subr.mxu0 0.0
    %1283 = vmatpush1.msra.mxu0 %v169
    %1284 = vmatprep.subr.mxu0 0.0
    %1285 = vmatpush1.msra.mxu0 %v170
    %1286 = vmatprep.subr.mxu0 0.0
    %1287 = vmatpush1.msra.mxu0 0.0
    %1288 = vmatprep.subr.mxu0 0.0
    %1289 = vmatpush1.msra.mxu0 0.0
    %1290 = vmatprep.subr.mxu0 0.0
    %1291 = vmatpush1.msra.mxu0 0.0
    %1292 = vmatprep.subr.mxu0 0.0
    %1293 = vmatpush1.msra.mxu0 0.0
    %1294 = vmatprep.subr.mxu0 0.0
    %1295 = vmatpush1.msra.mxu0 0.0
    %1296 = vmatprep.subr.mxu0 0.0
    %1297 = vmatpush1.msra.mxu0 0.0
    %1298 = vmatprep.subr.mxu0 0.0
    %1299 = vmatpush1.msra.mxu0 0.0
    %1300 = vmatprep.subr.mxu0 0.0
    %1301 = vmatpush1.msra.mxu0 0.0
    %1302 = vmatprep.subr.mxu0 0.0
    %1303 = vmatpush1.msra.mxu0 0.0
    %1304 = vmatprep.subr.mxu0 0.0
    %1305 = vmatpush1.msra.mxu0 0.0
    %1306 = vmatprep.subr.mxu0 0.0
    %1307 = vmatpush1.msra.mxu0 0.0
    %1308 = vmatprep.subr.mxu0 0.0
    %1309 = vmatpush1.msra.mxu0 0.0
    %1310 = vmatprep.subr.mxu0 0.0
    %1311 = vmatpush1.msra.mxu0 0.0
    %1312 = vmatprep.subr.mxu0 0.0
    %1313 = vmatpush1.msra.mxu0 0.0
    %1314 = vmatprep.subr.mxu0 0.0
    %1315 = vmatpush1.msra.mxu0 0.0
    %1316 = vmatprep.subr.mxu0 0.0
    %1317 = vmatpush1.msra.mxu0 0.0
    %1318 = vmatprep.mubr.f32.mxu0 0.0
    %1319 = vmatmul.mubr.f32.gmra.mrb[0].mxu0 %v1179
    %v1320 = vpop.f32.mrb[0].mxu0
    %v1321 = vadd.f32 0.0, %v1320
    %v1322 = vpop.f32.mrb[0].mxu0
    %1323 = vdwg.mxu0
    %v1325 = vrot.slane %v1321, 2
    %v1327 = vadd.f32 %v145, %v1325
    %v1328 = vtanh.pop %v1327
    %v1330 = vrot.slane %v1253, 2
    %v1332 = vrot.slane %v1328, 6
    %v1333 = vrot.slane %v1330, 6
    %1336 = vmatprep.subr.mxu0 0.0
    %1337 = vmatpush1.msra.mxu0 %v243
    %1338 = vmatprep.subr.mxu0 0.0
    %1339 = vmatpush1.msra.mxu0 %v244
    %1340 = vmatprep.subr.mxu0 0.0
    %1341 = vmatpush1.msra.mxu0 %v245
    %1342 = vmatprep.subr.mxu0 0.0
    %1343 = vmatpush1.msra.mxu0 %v246
    %1344 = vmatprep.subr.mxu0 0.0
    %1345 = vmatpush1.msra.mxu0 %v247
    %1346 = vmatprep.subr.mxu0 0.0
    %1347 = vmatpush1.msra.mxu0 %v248
    %1348 = vmatprep.subr.mxu0 0.0
    %1349 = vmatpush1.msra.mxu0 %v249
    %1350 = vmatprep.subr.mxu0 0.0
    %1351 = vmatpush1.msra.mxu0 %v250
    %1352 = vmatprep.subr.mxu0 0.0
    %1353 = vmatpush1.msra.mxu0 %v251
    %1354 = vmatprep.subr.mxu0 0.0
    %1355 = vmatpush1.msra.mxu0 %v252
    %1356 = vmatprep.subr.mxu0 0.0
    %1357 = vmatpush1.msra.mxu0 %v253
    %1358 = vmatprep.subr.mxu0 0.0
    %1359 = vmatpush1.msra.mxu0 %v254
    %1360 = vmatprep.subr.mxu0 0.0
    %1361 = vmatpush1.msra.mxu0 %v255
    %1362 = vmatprep.subr.mxu0 0.0
    %1363 = vmatpush1.msra.mxu0 %v256
    %1364 = vmatprep.subr.mxu0 0.0
    %1365 = vmatpush1.msra.mxu0 %v257
    %1366 = vmatprep.subr.mxu0 0.0
    %1367 = vmatpush1.msra.mxu0 %v258
    %1368 = vmatprep.subr.mxu0 0.0
    %1369 = vmatpush1.msra.mxu0 %v259
    %1370 = vmatprep.subr.mxu0 0.0
    %1371 = vmatpush1.msra.mxu0 %v260
    %1372 = vmatprep.subr.mxu0 0.0
    %1373 = vmatpush1.msra.mxu0 %v261
    %1374 = vmatprep.subr.mxu0 0.0
    %1375 = vmatpush1.msra.mxu0 %v262
    %1376 = vmatprep.subr.mxu0 0.0
    %1377 = vmatpush1.msra.mxu0 %v263
    %1378 = vmatprep.subr.mxu0 0.0
    %1379 = vmatpush1.msra.mxu0 %v264
    %1380 = vmatprep.subr.mxu0 0.0
    %1381 = vmatpush1.msra.mxu0 %v265
    %1382 = vmatprep.subr.mxu0 0.0
    %1383 = vmatpush1.msra.mxu0 %v266
    %1384 = vmatprep.subr.mxu0 0.0
    %1385 = vmatpush1.msra.mxu0 %v267
    %1386 = vmatprep.subr.mxu0 0.0
    %1387 = vmatpush1.msra.mxu0 %v268
    %1388 = vmatprep.subr.mxu0 0.0
    %1389 = vmatpush1.msra.mxu0 %v269
    %1390 = vmatprep.subr.mxu0 0.0
    %1391 = vmatpush1.msra.mxu0 %v270
    %1392 = vmatprep.subr.mxu0 0.0
    %1393 = vmatpush1.msra.mxu0 %v271
    %1394 = vmatprep.subr.mxu0 0.0
    %1395 = vmatpush1.msra.mxu0 %v272
    %1396 = vmatprep.subr.mxu0 0.0
    %1397 = vmatpush1.msra.mxu0 %v273
    %1398 = vmatprep.subr.mxu0 0.0
    %1399 = vmatpush1.msra.mxu0 %v274
    %1400 = vmatprep.mubr.f32.mxu0 %v1333
    %1401 = vmatmul.mubr.f32.gmra.mrb[0].mxu0 %v1332
    %v1402 = vpop.f32.mrb[0].mxu0
    %v1403 = vadd.f32 %v153, %v1402
    %v1404 = vpop.f32.mrb[0].mxu0
    %1405 = vdwg.mxu0
    %v1406 = vtanh.pop %v1403
    %1407 = vst [vmem:[%s6] sm:$0x3] %v1406
    // Predicated region
    $region34: #{simple_rnn_forward.1} parent=1 // pred_check
      _
    $region35: #{simple_rnn_forward.1} parent=1 // pred_check_branch
      %1409 = sbr.rel (0) target = $region37
    $region36: #{simple_rnn_forward.1} parent=1 // pred_region
      _
    $region37: #{simple_rnn_forward.1} parent=1 // pred_fallthru
      _
    // Predicated region
    $region38: #{simple_rnn_forward.1} parent=1 // pred_check
      _
    $region39: #{simple_rnn_forward.1} parent=1 // pred_check_branch
      %1411 = sbr.rel (0) target = $region41
    $region40: #{simple_rnn_forward.1} parent=1 // pred_region
      _
    $region41: #{simple_rnn_forward.1} parent=1 // pred_fallthru
      _
    %1412 = vsyncpa [#allocation3], 1
    %1413 = vsyncpa [#allocation5], 1

</llo_original>
